<compile_context>
chip_gen: v7x
topology: tpu7x:2x2x1
jax: 0.10.0
libtpu: 0.0.40
codegen_flags: <defaults>
</compile_context>

<pallas_src>
import functools
import math

import jax
import jax.numpy as jnp
from jax.experimental import pallas as pl
from jax.experimental.pallas import tpu as pltpu


def _round_up(x, m):
    return -(-x // m) * m


def lstm_text_kernel(x_ref, w_ih_ref, w_hh_ref, b_ref, w_fc_ref, b_fc_ref,
                     out_ref, gx_scr, h_all_scr, *, batch, hidden, row_align, unroll):
    """Single invocation (grid=()).

    Phase 1: hoisted input projection, one (T*B,E)@(E,4H) MXU matmul, bias folded in.
    Phase 2: serial recurrence; h/c live in vregs as fori_loop carries; per step only
             h @ W_hh (MXU) + one full-tile sigmoid + g-slice tanh + elementwise math.
    Phase 3: one batched (T*B,H)@(H,Cpad) FC and a single lane-dense store.
    """
    B, H = batch, hidden
    TB = gx_scr.shape[0]
    T = TB // B

    # ---- Phase 1: hoisted input projection (f32 accumulate, bias folded once). ----
    gx_scr[...] = (
        jnp.dot(x_ref[...], w_ih_ref[...], preferred_element_type=jnp.float32)
        + b_ref[...]
    ).astype(gx_scr.dtype)

    w_hh = w_hh_ref[...]  # load once; resident for the whole recurrence

    # ---- Phase 2: recurrence; h/c are vreg-resident loop carries (no VMEM h/c). ----
    def step(t, carry):
        h, c = carry
        # B (padded in the wrapper) is a multiple of row_align, so this dynamic
        # sublane slice is tile-aligned for the scratch dtype (8 f32 / 16 bf16 rows).
        row = pl.multiple_of(t * B, row_align)
        gates = gx_scr[pl.ds(row, B), :].astype(jnp.float32) + jnp.dot(
            h.astype(w_hh.dtype), w_hh, preferred_element_type=jnp.float32
        )  # (B, 4H); PyTorch gate order i, f, g, o; gate math stays f32 (v5e-safe)

        sg = jax.nn.sigmoid(gates)             # one full-tile EUP pass covers i, f, o
        i = sg[:, 0 * H:1 * H]
        f = sg[:, 1 * H:2 * H]
        o = sg[:, 3 * H:4 * H]
        g = jnp.tanh(gates[:, 2 * H:3 * H])    # tanh only on the g slice

        c_new = f * c + i * g
        h_new = o * jnp.tanh(c_new)
        h_all_scr[pl.ds(row, B), :] = h_new.astype(h_all_scr.dtype)
        return (h_new, c_new)

    h0 = jnp.zeros((B, H), jnp.float32)
    c0 = jnp.zeros((B, H), jnp.float32)
    jax.lax.fori_loop(0, T, step, (h0, c0), unroll=unroll)

    # ---- Phase 3: dropout(eval)=identity; one batched FC + one lane-dense store. ----
    out_ref[...] = (
        jnp.dot(h_all_scr[...], w_fc_ref[...], preferred_element_type=jnp.float32)
        + b_fc_ref[...]
    ).astype(out_ref.dtype)


def lstm_text_forward(token_ids, params, matmul_dtype=jnp.float32):
    """token_ids: (B, T) int32 -> logits (T, B, C) like the PyTorch module.

    matmul_dtype=jnp.bfloat16 feeds bf16 operands to the MXU (f32 accumulate) and
    halves the big VMEM scratches; recommended on v5e, v6e and v7x (gate math stays
    in f32 everywhere, so it is v5e-safe).  Default f32 matches the f32 reference.
    """
    emb = params["embedding"][token_ids]          # (B, T, E) gather (plain JAX glue)
    x = jnp.transpose(emb, (1, 0, 2))             # (T, B, E) seq-major
    T, B, E = x.shape
    H = params["w_hh"].shape[0]
    C = params["w_fc"].shape[1]

    itemsize = jnp.dtype(matmul_dtype).itemsize
    row_align = 8 * (4 // itemsize)               # sublane tile: 8 (f32) / 16 (bf16)
    B_pad = _round_up(B, row_align)               # alignment-safe per-step slices
    C_pad = _round_up(C, 128)                     # lane-dense FC output store

    if B_pad != B:
        x = jnp.pad(x, ((0, 0), (0, B_pad - B), (0, 0)))   # zero rows, sliced off below

    x_flat = x.reshape(T * B_pad, E).astype(matmul_dtype)
    w_ih = params["w_ih"].astype(matmul_dtype)
    w_hh = params["w_hh"].astype(matmul_dtype)
    w_fc = jnp.zeros((H, C_pad), matmul_dtype).at[:, :C].set(
        params["w_fc"].astype(matmul_dtype))
    b = (params["b_ih"] + params["b_hh"]).reshape(1, 4 * H).astype(jnp.float32)
    b_fc = jnp.zeros((1, C_pad), jnp.float32).at[0, :C].set(params["b_fc"])

    # VMEM budget: grid=() => no double-buffering; each operand resident exactly once.
    def tile_bytes(shape, dtype):
        it = jnp.dtype(dtype).itemsize
        r = _round_up(shape[-2], 8 * (4 // it))
        c = _round_up(shape[-1], 128)
        return r * c * it

    needed = (
        tile_bytes((T * B_pad, E), matmul_dtype)
        + tile_bytes((E, 4 * H), matmul_dtype)
        + tile_bytes((H, 4 * H), matmul_dtype)
        + tile_bytes((1, 4 * H), jnp.float32)
        + tile_bytes((H, C_pad), matmul_dtype)
        + tile_bytes((1, C_pad), jnp.float32)
        + tile_bytes((T * B_pad, C_pad), jnp.float32)    # output
        + tile_bytes((T * B_pad, 4 * H), matmul_dtype)   # gates_x scratch
        + tile_bytes((T * B_pad, H), matmul_dtype)       # h_all scratch
    )
    # Headroom for compiler-internal scratch; cap at 48 MiB so it fits v7x's 64 MiB.
    vmem_limit = int(min(max(2 * needed + (4 << 20), 16 << 20), 48 << 20))

    unroll = True if T <= 8 else 8                 # partial unroll for longer T

    kernel = functools.partial(
        lstm_text_kernel, batch=B_pad, hidden=H, row_align=row_align, unroll=unroll)

    out = pl.pallas_call(
        kernel,
        out_shape=jax.ShapeDtypeStruct((T * B_pad, C_pad), jnp.float32),
        # grid=(): one invocation; every operand is a whole-array VMEM block.
        in_specs=[pl.BlockSpec(memory_space=pltpu.MemorySpace.VMEM)] * 6,
        out_specs=pl.BlockSpec(memory_space=pltpu.MemorySpace.VMEM),
        scratch_shapes=[
            pltpu.VMEM((T * B_pad, 4 * H), matmul_dtype),   # gates_x (hoisted projection)
            pltpu.VMEM((T * B_pad, H), matmul_dtype),       # all hidden states h_t
        ],
        compiler_params=pltpu.CompilerParams(vmem_limit_bytes=vmem_limit),
    )(x_flat, w_ih, w_hh, b, w_fc, b_fc)

    return out.reshape(T, B_pad, C_pad)[:, :B, :C]


def init_params(key, vocab_size, embedding_dim, class_num, hidden_size):
    ks = jax.random.split(key, 7)
    s = 1.0 / float(hidden_size) ** 0.5
    return {
        "embedding": jax.random.normal(ks[0], (vocab_size, embedding_dim), jnp.float32),
        # stored transposed relative to PyTorch (out_features, in_features)
        "w_ih": jax.random.uniform(ks[1], (embedding_dim, 4 * hidden_size), jnp.float32, -s, s),
        "w_hh": jax.random.uniform(ks[2], (hidden_size, 4 * hidden_size), jnp.float32, -s, s),
        "b_ih": jax.random.uniform(ks[3], (4 * hidden_size,), jnp.float32, -s, s),
        "b_hh": jax.random.uniform(ks[4], (4 * hidden_size,), jnp.float32, -s, s),
        "w_fc": jax.random.uniform(ks[5], (hidden_size, class_num), jnp.float32, -s, s),
        "b_fc": jax.random.uniform(ks[6], (class_num,), jnp.float32, -s, s),
    }


def lstm_text_reference(token_ids, params):
    """Pure-JAX reference (lax.scan) with identical semantics, for validation."""
    emb = params["embedding"][token_ids]
    x = jnp.transpose(emb, (1, 0, 2))                    # (T, B, E)
    B = x.shape[1]
    H = params["w_hh"].shape[0]
    b = params["b_ih"] + params["b_hh"]

    def step(carry, x_t):
        h, c = carry
        gates = x_t @ params["w_ih"] + h @ params["w_hh"] + b
        i = jax.nn.sigmoid(gates[:, 0 * H:1 * H])
        f = jax.nn.sigmoid(gates[:, 1 * H:2 * H])
        g = jnp.tanh(gates[:, 2 * H:3 * H])
        o = jax.nn.sigmoid(gates[:, 3 * H:4 * H])
        c_new = f * c + i * g
        h_new = o * jnp.tanh(c_new)
        return (h_new, c_new), h_new

    h0 = jnp.zeros((B, H), jnp.float32)
    c0 = jnp.zeros((B, H), jnp.float32)
    _, hs = jax.lax.scan(step, (h0, c0), x)
    return hs @ params["w_fc"] + params["b_fc"]


if __name__ == "__main__":
    # Small, module-consistent shapes.
    vocab_size, embedding_dim, class_num, hidden_size = 100, 32, 4, 32
    batch_size, seq_len = 8, 8

    key = jax.random.PRNGKey(0)
    pkey, dkey = jax.random.split(key)
    params = init_params(pkey, vocab_size, embedding_dim, class_num, hidden_size)
    token_ids = jax.random.randint(dkey, (batch_size, seq_len), 0, vocab_size, jnp.int32)

    ref = jax.block_until_ready(lstm_text_reference(token_ids, params))

    # f32 MXU path: matches the f32 reference tightly.
    fwd_f32 = jax.jit(functools.partial(lstm_text_forward, matmul_dtype=jnp.float32))
    logits = jax.block_until_ready(fwd_f32(token_ids, params))
    assert logits.shape == (seq_len, batch_size, class_num)
    assert jnp.allclose(logits, ref, atol=1e-4, rtol=1e-4)

    # bf16 MXU-input path (f32 accumulate / f32 gate math): looser tolerance.
    fwd_bf16 = jax.jit(functools.partial(lstm_text_forward, matmul_dtype=jnp.bfloat16))
    logits_bf16 = jax.block_until_ready(fwd_bf16(token_ids, params))
    assert logits_bf16.shape == (seq_len, batch_size, class_num)
    assert jnp.allclose(logits_bf16, ref, atol=1e-1, rtol=1e-1)

    print("KERNEL_OK")
</pallas_src>

<mosaic_0001>
module attributes {stable_mosaic.version = 11 : i64} {
  func.func @lstm_text_kernel(%arg0: memref<64x32xf32, #tpu.memory_space<vmem>>, %arg1: memref<32x128xf32, #tpu.memory_space<vmem>>, %arg2: memref<32x128xf32, #tpu.memory_space<vmem>>, %arg3: memref<1x128xf32, #tpu.memory_space<vmem>>, %arg4: memref<32x128xf32, #tpu.memory_space<vmem>>, %arg5: memref<1x128xf32, #tpu.memory_space<vmem>>, %arg6: memref<64x128xf32, #tpu.memory_space<vmem>>, %arg7: memref<64x128xf32, #tpu.memory_space<vmem>>, %arg8: memref<64x32xf32, #tpu.memory_space<vmem>>) attributes {dimension_semantics = [], scalar_prefetch = 0 : i64, scratch_operands = 2 : i64, tpu.core_type = #tpu.core_type<tc>} {
    %c0 = arith.constant 0 : index
    %c0_0 = arith.constant 0 : index
    %0 = vector.load %arg0[%c0, %c0_0] : memref<64x32xf32, #tpu.memory_space<vmem>>, vector<64x32xf32>
    %c0_1 = arith.constant 0 : index
    %c0_2 = arith.constant 0 : index
    %1 = vector.load %arg1[%c0_1, %c0_2] : memref<32x128xf32, #tpu.memory_space<vmem>>, vector<32x128xf32>
    %cst = arith.constant dense<0.000000e+00> : vector<64x128xf32>
    %2 = tpu.matmul %0, %1, %cst {dimension_numbers = #tpu.dot_dimension_numbers<[1], [0], [0], [1], [0, 0, 1, 1], [], []>} : vector<64x32xf32>, vector<32x128xf32>, vector<64x128xf32> -> vector<64x128xf32>
    %c0_3 = arith.constant 0 : index
    %c0_4 = arith.constant 0 : index
    %3 = vector.load %arg3[%c0_3, %c0_4] : memref<1x128xf32, #tpu.memory_space<vmem>>, vector<1x128xf32>
    %4 = vector.broadcast %3 : vector<1x128xf32> to vector<64x128xf32>
    %5 = arith.addf %2, %4 : vector<64x128xf32>
    %c0_5 = arith.constant 0 : index
    %c0_6 = arith.constant 0 : index
    %6 = vector.load %arg7[%c0_5, %c0_6] : memref<64x128xf32, #tpu.memory_space<vmem>>, vector<64x128xf32>
    tpu.vector_store %arg7[%c0_5, %c0_6], %5 {strides = array<i32>} : memref<64x128xf32, #tpu.memory_space<vmem>>, vector<64x128xf32>,
    %c0_7 = arith.constant 0 : index
    %c0_8 = arith.constant 0 : index
    %7 = vector.load %arg2[%c0_7, %c0_8] : memref<32x128xf32, #tpu.memory_space<vmem>>, vector<32x128xf32>
    %cst_9 = arith.constant 0.000000e+00 : f32
    %8 = vector.broadcast %cst_9 : f32 to vector<8x32xf32>
    %cst_10 = arith.constant 0.000000e+00 : f32
    %9 = vector.broadcast %cst_10 : f32 to vector<8x32xf32>
    %c0_i32 = arith.constant 0 : i32
    %c8_i32 = arith.constant 8 : i32
    %10 = arith.muli %c0_i32, %c8_i32 : i32
    %11 = tpu.assume_multiple %10, 8 : i32
    %12 = arith.index_cast %11 : i32 to index
    %c0_11 = arith.constant 0 : index
    %13 = vector.load %arg7[%12, %c0_11] : memref<64x128xf32, #tpu.memory_space<vmem>>, vector<8x128xf32>
    %cst_12 = arith.constant dense<0.000000e+00> : vector<8x128xf32>
    %14 = tpu.matmul %8, %7, %cst_12 {dimension_numbers = #tpu.dot_dimension_numbers<[1], [0], [0], [1], [0, 0, 1, 1], [], []>} : vector<8x32xf32>, vector<32x128xf32>, vector<8x128xf32> -> vector<8x128xf32>
    %15 = arith.addf %13, %14 : vector<8x128xf32>
    %16 = arith.negf %15 : vector<8x128xf32>
    %17 = math.exp %16 : vector<8x128xf32>
    %cst_13 = arith.constant 1.000000e+00 : f32
    %18 = vector.broadcast %cst_13 : f32 to vector<8x128xf32>
    %19 = arith.addf %18, %17 : vector<8x128xf32>
    %20 = arith.divf %18, %19 : vector<8x128xf32>
    %21 = vector.extract_strided_slice %20 {offsets = [0, 0], sizes = [8, 32], strides = [1, 1]} : vector<8x128xf32> to vector<8x32xf32>
    %22 = vector.extract_strided_slice %20 {offsets = [0, 32], sizes = [8, 32], strides = [1, 1]} : vector<8x128xf32> to vector<8x32xf32>
    %23 = vector.extract_strided_slice %20 {offsets = [0, 96], sizes = [8, 32], strides = [1, 1]} : vector<8x128xf32> to vector<8x32xf32>
    %24 = vector.extract_strided_slice %15 {offsets = [0, 64], sizes = [8, 32], strides = [1, 1]} : vector<8x128xf32> to vector<8x32xf32>
    %25 = math.tanh %24 : vector<8x32xf32>
    %26 = arith.mulf %22, %9 : vector<8x32xf32>
    %27 = arith.mulf %21, %25 : vector<8x32xf32>
    %28 = arith.addf %26, %27 : vector<8x32xf32>
    %29 = math.tanh %28 : vector<8x32xf32>
    %30 = arith.mulf %23, %29 : vector<8x32xf32>
    %31 = arith.index_cast %11 : i32 to index
    %c0_14 = arith.constant 0 : index
    %32 = vector.load %arg8[%31, %c0_14] : memref<64x32xf32, #tpu.memory_space<vmem>>, vector<8x32xf32>
    tpu.vector_store %arg8[%31, %c0_14], %30 {strides = array<i32>} : memref<64x32xf32, #tpu.memory_space<vmem>>, vector<8x32xf32>,
    %c1_i32 = arith.constant 1 : i32
    %c8_i32_15 = arith.constant 8 : i32
    %33 = arith.muli %c1_i32, %c8_i32_15 : i32
    %34 = tpu.assume_multiple %33, 8 : i32
    %35 = arith.index_cast %34 : i32 to index
    %c0_16 = arith.constant 0 : index
    %36 = vector.load %arg7[%35, %c0_16] : memref<64x128xf32, #tpu.memory_space<vmem>>, vector<8x128xf32>
    %cst_17 = arith.constant dense<0.000000e+00> : vector<8x128xf32>
    %37 = tpu.matmul %30, %7, %cst_17 {dimension_numbers = #tpu.dot_dimension_numbers<[1], [0], [0], [1], [0, 0, 1, 1], [], []>} : vector<8x32xf32>, vector<32x128xf32>, vector<8x128xf32> -> vector<8x128xf32>
    %38 = arith.addf %36, %37 : vector<8x128xf32>
    %39 = arith.negf %38 : vector<8x128xf32>
    %40 = math.exp %39 : vector<8x128xf32>
    %cst_18 = arith.constant 1.000000e+00 : f32
    %41 = vector.broadcast %cst_18 : f32 to vector<8x128xf32>
    %42 = arith.addf %41, %40 : vector<8x128xf32>
    %43 = arith.divf %41, %42 : vector<8x128xf32>
    %44 = vector.extract_strided_slice %43 {offsets = [0, 0], sizes = [8, 32], strides = [1, 1]} : vector<8x128xf32> to vector<8x32xf32>
    %45 = vector.extract_strided_slice %43 {offsets = [0, 32], sizes = [8, 32], strides = [1, 1]} : vector<8x128xf32> to vector<8x32xf32>
    %46 = vector.extract_strided_slice %43 {offsets = [0, 96], sizes = [8, 32], strides = [1, 1]} : vector<8x128xf32> to vector<8x32xf32>
    %47 = vector.extract_strided_slice %38 {offsets = [0, 64], sizes = [8, 32], strides = [1, 1]} : vector<8x128xf32> to vector<8x32xf32>
    %48 = math.tanh %47 : vector<8x32xf32>
    %49 = arith.mulf %45, %28 : vector<8x32xf32>
    %50 = arith.mulf %44, %48 : vector<8x32xf32>
    %51 = arith.addf %49, %50 : vector<8x32xf32>
    %52 = math.tanh %51 : vector<8x32xf32>
    %53 = arith.mulf %46, %52 : vector<8x32xf32>
    %54 = arith.index_cast %34 : i32 to index
    %c0_19 = arith.constant 0 : index
    %55 = vector.load %arg8[%54, %c0_19] : memref<64x32xf32, #tpu.memory_space<vmem>>, vector<8x32xf32>
    tpu.vector_store %arg8[%54, %c0_19], %53 {strides = array<i32>} : memref<64x32xf32, #tpu.memory_space<vmem>>, vector<8x32xf32>,
    %c2_i32 = arith.constant 2 : i32
    %c8_i32_20 = arith.constant 8 : i32
    %56 = arith.muli %c2_i32, %c8_i32_20 : i32
    %57 = tpu.assume_multiple %56, 8 : i32
    %58 = arith.index_cast %57 : i32 to index
    %c0_21 = arith.constant 0 : index
    %59 = vector.load %arg7[%58, %c0_21] : memref<64x128xf32, #tpu.memory_space<vmem>>, vector<8x128xf32>
    %cst_22 = arith.constant dense<0.000000e+00> : vector<8x128xf32>
    %60 = tpu.matmul %53, %7, %cst_22 {dimension_numbers = #tpu.dot_dimension_numbers<[1], [0], [0], [1], [0, 0, 1, 1], [], []>} : vector<8x32xf32>, vector<32x128xf32>, vector<8x128xf32> -> vector<8x128xf32>
    %61 = arith.addf %59, %60 : vector<8x128xf32>
    %62 = arith.negf %61 : vector<8x128xf32>
    %63 = math.exp %62 : vector<8x128xf32>
    %cst_23 = arith.constant 1.000000e+00 : f32
    %64 = vector.broadcast %cst_23 : f32 to vector<8x128xf32>
    %65 = arith.addf %64, %63 : vector<8x128xf32>
    %66 = arith.divf %64, %65 : vector<8x128xf32>
    %67 = vector.extract_strided_slice %66 {offsets = [0, 0], sizes = [8, 32], strides = [1, 1]} : vector<8x128xf32> to vector<8x32xf32>
    %68 = vector.extract_strided_slice %66 {offsets = [0, 32], sizes = [8, 32], strides = [1, 1]} : vector<8x128xf32> to vector<8x32xf32>
    %69 = vector.extract_strided_slice %66 {offsets = [0, 96], sizes = [8, 32], strides = [1, 1]} : vector<8x128xf32> to vector<8x32xf32>
    %70 = vector.extract_strided_slice %61 {offsets = [0, 64], sizes = [8, 32], strides = [1, 1]} : vector<8x128xf32> to vector<8x32xf32>
    %71 = math.tanh %70 : vector<8x32xf32>
    %72 = arith.mulf %68, %51 : vector<8x32xf32>
    %73 = arith.mulf %67, %71 : vector<8x32xf32>
    %74 = arith.addf %72, %73 : vector<8x32xf32>
    %75 = math.tanh %74 : vector<8x32xf32>
    %76 = arith.mulf %69, %75 : vector<8x32xf32>
    %77 = arith.index_cast %57 : i32 to index
    %c0_24 = arith.constant 0 : index
    %78 = vector.load %arg8[%77, %c0_24] : memref<64x32xf32, #tpu.memory_space<vmem>>, vector<8x32xf32>
    tpu.vector_store %arg8[%77, %c0_24], %76 {strides = array<i32>} : memref<64x32xf32, #tpu.memory_space<vmem>>, vector<8x32xf32>,
    %c3_i32 = arith.constant 3 : i32
    %c8_i32_25 = arith.constant 8 : i32
    %79 = arith.muli %c3_i32, %c8_i32_25 : i32
    %80 = tpu.assume_multiple %79, 8 : i32
    %81 = arith.index_cast %80 : i32 to index
    %c0_26 = arith.constant 0 : index
    %82 = vector.load %arg7[%81, %c0_26] : memref<64x128xf32, #tpu.memory_space<vmem>>, vector<8x128xf32>
    %cst_27 = arith.constant dense<0.000000e+00> : vector<8x128xf32>
    %83 = tpu.matmul %76, %7, %cst_27 {dimension_numbers = #tpu.dot_dimension_numbers<[1], [0], [0], [1], [0, 0, 1, 1], [], []>} : vector<8x32xf32>, vector<32x128xf32>, vector<8x128xf32> -> vector<8x128xf32>
    %84 = arith.addf %82, %83 : vector<8x128xf32>
    %85 = arith.negf %84 : vector<8x128xf32>
    %86 = math.exp %85 : vector<8x128xf32>
    %cst_28 = arith.constant 1.000000e+00 : f32
    %87 = vector.broadcast %cst_28 : f32 to vector<8x128xf32>
    %88 = arith.addf %87, %86 : vector<8x128xf32>
    %89 = arith.divf %87, %88 : vector<8x128xf32>
    %90 = vector.extract_strided_slice %89 {offsets = [0, 0], sizes = [8, 32], strides = [1, 1]} : vector<8x128xf32> to vector<8x32xf32>
    %91 = vector.extract_strided_slice %89 {offsets = [0, 32], sizes = [8, 32], strides = [1, 1]} : vector<8x128xf32> to vector<8x32xf32>
    %92 = vector.extract_strided_slice %89 {offsets = [0, 96], sizes = [8, 32], strides = [1, 1]} : vector<8x128xf32> to vector<8x32xf32>
    %93 = vector.extract_strided_slice %84 {offsets = [0, 64], sizes = [8, 32], strides = [1, 1]} : vector<8x128xf32> to vector<8x32xf32>
    %94 = math.tanh %93 : vector<8x32xf32>
    %95 = arith.mulf %91, %74 : vector<8x32xf32>
    %96 = arith.mulf %90, %94 : vector<8x32xf32>
    %97 = arith.addf %95, %96 : vector<8x32xf32>
    %98 = math.tanh %97 : vector<8x32xf32>
    %99 = arith.mulf %92, %98 : vector<8x32xf32>
    %100 = arith.index_cast %80 : i32 to index
    %c0_29 = arith.constant 0 : index
    %101 = vector.load %arg8[%100, %c0_29] : memref<64x32xf32, #tpu.memory_space<vmem>>, vector<8x32xf32>
    tpu.vector_store %arg8[%100, %c0_29], %99 {strides = array<i32>} : memref<64x32xf32, #tpu.memory_space<vmem>>, vector<8x32xf32>,
    %c4_i32 = arith.constant 4 : i32
    %c8_i32_30 = arith.constant 8 : i32
    %102 = arith.muli %c4_i32, %c8_i32_30 : i32
    %103 = tpu.assume_multiple %102, 8 : i32
    %104 = arith.index_cast %103 : i32 to index
    %c0_31 = arith.constant 0 : index
    %105 = vector.load %arg7[%104, %c0_31] : memref<64x128xf32, #tpu.memory_space<vmem>>, vector<8x128xf32>
    %cst_32 = arith.constant dense<0.000000e+00> : vector<8x128xf32>
    %106 = tpu.matmul %99, %7, %cst_32 {dimension_numbers = #tpu.dot_dimension_numbers<[1], [0], [0], [1], [0, 0, 1, 1], [], []>} : vector<8x32xf32>, vector<32x128xf32>, vector<8x128xf32> -> vector<8x128xf32>
    %107 = arith.addf %105, %106 : vector<8x128xf32>
    %108 = arith.negf %107 : vector<8x128xf32>
    %109 = math.exp %108 : vector<8x128xf32>
    %cst_33 = arith.constant 1.000000e+00 : f32
    %110 = vector.broadcast %cst_33 : f32 to vector<8x128xf32>
    %111 = arith.addf %110, %109 : vector<8x128xf32>
    %112 = arith.divf %110, %111 : vector<8x128xf32>
    %113 = vector.extract_strided_slice %112 {offsets = [0, 0], sizes = [8, 32], strides = [1, 1]} : vector<8x128xf32> to vector<8x32xf32>
    %114 = vector.extract_strided_slice %112 {offsets = [0, 32], sizes = [8, 32], strides = [1, 1]} : vector<8x128xf32> to vector<8x32xf32>
    %115 = vector.extract_strided_slice %112 {offsets = [0, 96], sizes = [8, 32], strides = [1, 1]} : vector<8x128xf32> to vector<8x32xf32>
    %116 = vector.extract_strided_slice %107 {offsets = [0, 64], sizes = [8, 32], strides = [1, 1]} : vector<8x128xf32> to vector<8x32xf32>
    %117 = math.tanh %116 : vector<8x32xf32>
    %118 = arith.mulf %114, %97 : vector<8x32xf32>
    %119 = arith.mulf %113, %117 : vector<8x32xf32>
    %120 = arith.addf %118, %119 : vector<8x32xf32>
    %121 = math.tanh %120 : vector<8x32xf32>
    %122 = arith.mulf %115, %121 : vector<8x32xf32>
    %123 = arith.index_cast %103 : i32 to index
    %c0_34 = arith.constant 0 : index
    %124 = vector.load %arg8[%123, %c0_34] : memref<64x32xf32, #tpu.memory_space<vmem>>, vector<8x32xf32>
    tpu.vector_store %arg8[%123, %c0_34], %122 {strides = array<i32>} : memref<64x32xf32, #tpu.memory_space<vmem>>, vector<8x32xf32>,
    %c5_i32 = arith.constant 5 : i32
    %c8_i32_35 = arith.constant 8 : i32
    %125 = arith.muli %c5_i32, %c8_i32_35 : i32
    %126 = tpu.assume_multiple %125, 8 : i32
    %127 = arith.index_cast %126 : i32 to index
    %c0_36 = arith.constant 0 : index
    %128 = vector.load %arg7[%127, %c0_36] : memref<64x128xf32, #tpu.memory_space<vmem>>, vector<8x128xf32>
    %cst_37 = arith.constant dense<0.000000e+00> : vector<8x128xf32>
    %129 = tpu.matmul %122, %7, %cst_37 {dimension_numbers = #tpu.dot_dimension_numbers<[1], [0], [0], [1], [0, 0, 1, 1], [], []>} : vector<8x32xf32>, vector<32x128xf32>, vector<8x128xf32> -> vector<8x128xf32>
    %130 = arith.addf %128, %129 : vector<8x128xf32>
    %131 = arith.negf %130 : vector<8x128xf32>
    %132 = math.exp %131 : vector<8x128xf32>
    %cst_38 = arith.constant 1.000000e+00 : f32
    %133 = vector.broadcast %cst_38 : f32 to vector<8x128xf32>
    %134 = arith.addf %133, %132 : vector<8x128xf32>
    %135 = arith.divf %133, %134 : vector<8x128xf32>
    %136 = vector.extract_strided_slice %135 {offsets = [0, 0], sizes = [8, 32], strides = [1, 1]} : vector<8x128xf32> to vector<8x32xf32>
    %137 = vector.extract_strided_slice %135 {offsets = [0, 32], sizes = [8, 32], strides = [1, 1]} : vector<8x128xf32> to vector<8x32xf32>
    %138 = vector.extract_strided_slice %135 {offsets = [0, 96], sizes = [8, 32], strides = [1, 1]} : vector<8x128xf32> to vector<8x32xf32>
    %139 = vector.extract_strided_slice %130 {offsets = [0, 64], sizes = [8, 32], strides = [1, 1]} : vector<8x128xf32> to vector<8x32xf32>
    %140 = math.tanh %139 : vector<8x32xf32>
    %141 = arith.mulf %137, %120 : vector<8x32xf32>
    %142 = arith.mulf %136, %140 : vector<8x32xf32>
    %143 = arith.addf %141, %142 : vector<8x32xf32>
    %144 = math.tanh %143 : vector<8x32xf32>
    %145 = arith.mulf %138, %144 : vector<8x32xf32>
    %146 = arith.index_cast %126 : i32 to index
    %c0_39 = arith.constant 0 : index
    %147 = vector.load %arg8[%146, %c0_39] : memref<64x32xf32, #tpu.memory_space<vmem>>, vector<8x32xf32>
    tpu.vector_store %arg8[%146, %c0_39], %145 {strides = array<i32>} : memref<64x32xf32, #tpu.memory_space<vmem>>, vector<8x32xf32>,
    %c6_i32 = arith.constant 6 : i32
    %c8_i32_40 = arith.constant 8 : i32
    %148 = arith.muli %c6_i32, %c8_i32_40 : i32
    %149 = tpu.assume_multiple %148, 8 : i32
    %150 = arith.index_cast %149 : i32 to index
    %c0_41 = arith.constant 0 : index
    %151 = vector.load %arg7[%150, %c0_41] : memref<64x128xf32, #tpu.memory_space<vmem>>, vector<8x128xf32>
    %cst_42 = arith.constant dense<0.000000e+00> : vector<8x128xf32>
    %152 = tpu.matmul %145, %7, %cst_42 {dimension_numbers = #tpu.dot_dimension_numbers<[1], [0], [0], [1], [0, 0, 1, 1], [], []>} : vector<8x32xf32>, vector<32x128xf32>, vector<8x128xf32> -> vector<8x128xf32>
    %153 = arith.addf %151, %152 : vector<8x128xf32>
    %154 = arith.negf %153 : vector<8x128xf32>
    %155 = math.exp %154 : vector<8x128xf32>
    %cst_43 = arith.constant 1.000000e+00 : f32
    %156 = vector.broadcast %cst_43 : f32 to vector<8x128xf32>
    %157 = arith.addf %156, %155 : vector<8x128xf32>
    %158 = arith.divf %156, %157 : vector<8x128xf32>
    %159 = vector.extract_strided_slice %158 {offsets = [0, 0], sizes = [8, 32], strides = [1, 1]} : vector<8x128xf32> to vector<8x32xf32>
    %160 = vector.extract_strided_slice %158 {offsets = [0, 32], sizes = [8, 32], strides = [1, 1]} : vector<8x128xf32> to vector<8x32xf32>
    %161 = vector.extract_strided_slice %158 {offsets = [0, 96], sizes = [8, 32], strides = [1, 1]} : vector<8x128xf32> to vector<8x32xf32>
    %162 = vector.extract_strided_slice %153 {offsets = [0, 64], sizes = [8, 32], strides = [1, 1]} : vector<8x128xf32> to vector<8x32xf32>
    %163 = math.tanh %162 : vector<8x32xf32>
    %164 = arith.mulf %160, %143 : vector<8x32xf32>
    %165 = arith.mulf %159, %163 : vector<8x32xf32>
    %166 = arith.addf %164, %165 : vector<8x32xf32>
    %167 = math.tanh %166 : vector<8x32xf32>
    %168 = arith.mulf %161, %167 : vector<8x32xf32>
    %169 = arith.index_cast %149 : i32 to index
    %c0_44 = arith.constant 0 : index
    %170 = vector.load %arg8[%169, %c0_44] : memref<64x32xf32, #tpu.memory_space<vmem>>, vector<8x32xf32>
    tpu.vector_store %arg8[%169, %c0_44], %168 {strides = array<i32>} : memref<64x32xf32, #tpu.memory_space<vmem>>, vector<8x32xf32>,
    %c7_i32 = arith.constant 7 : i32
    %c8_i32_45 = arith.constant 8 : i32
    %171 = arith.muli %c7_i32, %c8_i32_45 : i32
    %172 = tpu.assume_multiple %171, 8 : i32
    %173 = arith.index_cast %172 : i32 to index
    %c0_46 = arith.constant 0 : index
    %174 = vector.load %arg7[%173, %c0_46] : memref<64x128xf32, #tpu.memory_space<vmem>>, vector<8x128xf32>
    %cst_47 = arith.constant dense<0.000000e+00> : vector<8x128xf32>
    %175 = tpu.matmul %168, %7, %cst_47 {dimension_numbers = #tpu.dot_dimension_numbers<[1], [0], [0], [1], [0, 0, 1, 1], [], []>} : vector<8x32xf32>, vector<32x128xf32>, vector<8x128xf32> -> vector<8x128xf32>
    %176 = arith.addf %174, %175 : vector<8x128xf32>
    %177 = arith.negf %176 : vector<8x128xf32>
    %178 = math.exp %177 : vector<8x128xf32>
    %cst_48 = arith.constant 1.000000e+00 : f32
    %179 = vector.broadcast %cst_48 : f32 to vector<8x128xf32>
    %180 = arith.addf %179, %178 : vector<8x128xf32>
    %181 = arith.divf %179, %180 : vector<8x128xf32>
    %182 = vector.extract_strided_slice %181 {offsets = [0, 0], sizes = [8, 32], strides = [1, 1]} : vector<8x128xf32> to vector<8x32xf32>
    %183 = vector.extract_strided_slice %181 {offsets = [0, 32], sizes = [8, 32], strides = [1, 1]} : vector<8x128xf32> to vector<8x32xf32>
    %184 = vector.extract_strided_slice %181 {offsets = [0, 96], sizes = [8, 32], strides = [1, 1]} : vector<8x128xf32> to vector<8x32xf32>
    %185 = vector.extract_strided_slice %176 {offsets = [0, 64], sizes = [8, 32], strides = [1, 1]} : vector<8x128xf32> to vector<8x32xf32>
    %186 = math.tanh %185 : vector<8x32xf32>
    %187 = arith.mulf %183, %166 : vector<8x32xf32>
    %188 = arith.mulf %182, %186 : vector<8x32xf32>
    %189 = arith.addf %187, %188 : vector<8x32xf32>
    %190 = math.tanh %189 : vector<8x32xf32>
    %191 = arith.mulf %184, %190 : vector<8x32xf32>
    %192 = arith.index_cast %172 : i32 to index
    %c0_49 = arith.constant 0 : index
    %193 = vector.load %arg8[%192, %c0_49] : memref<64x32xf32, #tpu.memory_space<vmem>>, vector<8x32xf32>
    tpu.vector_store %arg8[%192, %c0_49], %191 {strides = array<i32>} : memref<64x32xf32, #tpu.memory_space<vmem>>, vector<8x32xf32>,
    %c8_i32_50 = arith.constant 8 : i32
    %c0_51 = arith.constant 0 : index
    %c0_52 = arith.constant 0 : index
    %194 = vector.load %arg8[%c0_51, %c0_52] : memref<64x32xf32, #tpu.memory_space<vmem>>, vector<64x32xf32>
    %c0_53 = arith.constant 0 : index
    %c0_54 = arith.constant 0 : index
    %195 = vector.load %arg4[%c0_53, %c0_54] : memref<32x128xf32, #tpu.memory_space<vmem>>, vector<32x128xf32>
    %cst_55 = arith.constant dense<0.000000e+00> : vector<64x128xf32>
    %196 = tpu.matmul %194, %195, %cst_55 {dimension_numbers = #tpu.dot_dimension_numbers<[1], [0], [0], [1], [0, 0, 1, 1], [], []>} : vector<64x32xf32>, vector<32x128xf32>, vector<64x128xf32> -> vector<64x128xf32>
    %c0_56 = arith.constant 0 : index
    %c0_57 = arith.constant 0 : index
    %197 = vector.load %arg5[%c0_56, %c0_57] : memref<1x128xf32, #tpu.memory_space<vmem>>, vector<1x128xf32>
    %198 = vector.broadcast %197 : vector<1x128xf32> to vector<64x128xf32>
    %199 = arith.addf %196, %198 : vector<64x128xf32>
    %c0_58 = arith.constant 0 : index
    %c0_59 = arith.constant 0 : index
    %200 = vector.load %arg6[%c0_58, %c0_59] : memref<64x128xf32, #tpu.memory_space<vmem>>, vector<64x128xf32>
    tpu.vector_store %arg6[%c0_58, %c0_59], %199 {strides = array<i32>} : memref<64x128xf32, #tpu.memory_space<vmem>>, vector<64x128xf32>,
    return
  }
}

</mosaic_0001>

<llo_original>
// kernel: lstm_text_forward.1
$region0: #{lstm_text_forward.1}
  #allocation0 [shape = 'u32[]', space=smem, size = 0x4, offset = 0x4, fixed_abs, tag = 'smem constant byte address 0x4 - core index']
  #allocation1 [shape = 'u32[144,128]{1,0:T(1,128)}', space=vmem, size = 0x12000, scoped, tag = 'internal scratch']
  #allocation2 [shape = 'f32[64,128]{1,0:T(8,128)}', space=vmem, size = 0x8000, scoped, tag = 'scratch operand']
  #allocation3 [shape = 'f32[64,32]{1,0:T(8,128)}', space=vmem, size = 0x8000, scoped, tag = 'scratch operand']
  %s0 = inlined_call_operand.vmem [shape: f32[64,32], index: 0, kind: input, shape index: {}]
  %s1 = inlined_call_operand.vmem [shape: f32[32,128], index: 1, kind: input, shape index: {}]
  %s2 = inlined_call_operand.vmem [shape: f32[32,128], index: 2, kind: input, shape index: {}]
  %s3 = inlined_call_operand.vmem [shape: f32[1,128], index: 3, kind: input, shape index: {}]
  %s4 = inlined_call_operand.vmem [shape: f32[32,128], index: 4, kind: input, shape index: {}]
  %s5 = inlined_call_operand.vmem [shape: f32[1,128], index: 5, kind: input, shape index: {}]
  %s6 = inlined_call_operand.vmem [shape: f32[64,128], index: 6, kind: output, shape index: {}]
  %s7 = sld [smem:[#allocation0]]
  $region34: #{lstm_text_forward.1} parent=0
    _
  %s9 = ssub.s32 1, %s7
  %s10 = scalar_select 0, %s9, %s7
  // Predicated region
  $region2: #{lstm_text_forward.1} parent=0 // pred_check
    _
  $region3: #{lstm_text_forward.1} parent=0 // pred_check_branch
    %12 = sbr.rel (0) target = $region5
  $region4: #{lstm_text_forward.1} parent=0 // pred_region
    _
  $region5: #{lstm_text_forward.1} parent=0 // pred_fallthru
    _
  // Predicated region
  $region6: #{lstm_text_forward.1} parent=0 // pred_check
    _
  $region7: #{lstm_text_forward.1} parent=0 // pred_check_branch
    %14 = sbr.rel (0) target = $region9
  $region8: #{lstm_text_forward.1} parent=0 // pred_region
    _
  $region9: #{lstm_text_forward.1} parent=0 // pred_fallthru
    _
  // Predicated region
  $region10: #{lstm_text_forward.1} parent=0 // pred_check
    _
  $region11: #{lstm_text_forward.1} parent=0 // pred_check_branch
    %16 = sbr.rel (0) target = $region13
  $region12: #{lstm_text_forward.1} parent=0 // pred_region
    _
  $region13: #{lstm_text_forward.1} parent=0 // pred_fallthru
    _
  // Predicated region
  $region14: #{lstm_text_forward.1} parent=0 // pred_check
    _
  $region15: #{lstm_text_forward.1} parent=0 // pred_check_branch
    %18 = sbr.rel (0) target = $region17
  $region16: #{lstm_text_forward.1} parent=0 // pred_region
    _
  $region17: #{lstm_text_forward.1} parent=0 // pred_fallthru
    _
  // Predicated region
  $region18: #{lstm_text_forward.1} parent=0 // pred_check
    _
  $region19: #{lstm_text_forward.1} parent=0 // pred_check_branch
    %20 = sbr.rel (0) target = $region21
  $region20: #{lstm_text_forward.1} parent=0 // pred_region
    _
  $region21: #{lstm_text_forward.1} parent=0 // pred_fallthru
    _
  // Predicated region
  $region22: #{lstm_text_forward.1} parent=0 // pred_check
    _
  $region23: #{lstm_text_forward.1} parent=0 // pred_check_branch
    %22 = sbr.rel (0) target = $region25
  $region24: #{lstm_text_forward.1} parent=0 // pred_region
    _
  $region25: #{lstm_text_forward.1} parent=0 // pred_fallthru
    _
  %v23 = vld [vmem:[%s0] sm:$0xff]
  %v24 = vld [vmem:[%s0 + $0x8] sm:$0xff]
  %v25 = vld [vmem:[%s0 + $0x10] sm:$0xff]
  %v26 = vld [vmem:[%s0 + $0x18] sm:$0xff]
  %v27 = vld [vmem:[%s0 + $0x20] sm:$0xff]
  %v28 = vld [vmem:[%s0 + $0x28] sm:$0xff]
  %v29 = vld [vmem:[%s0 + $0x30] sm:$0xff]
  %v30 = vld [vmem:[%s0 + $0x38] sm:$0xff]
  %v31 = vld [vmem:[%s1] sm:$0xff]
  %v32 = vld [vmem:[%s1 + $0x8] sm:$0xff]
  %v33 = vld [vmem:[%s1 + $0x10] sm:$0xff]
  %v34 = vld [vmem:[%s1 + $0x18] sm:$0xff]
  %v35 = vld [vmem:[%s3] sm:$0x1]
  %v37 = vlaneseq
  %v38 = vshrl.u32 %v37, 7
  %v39 = vsub.s32 0, %v38
  %v40 = vrot.slane %v35, %v39
  %vm42 = vcmask 261120
  %v44 = vsel %vm42, %v23, 0
  %v47 = vsel %vm42, %v24, 0
  %v50 = vsel %vm42, %v25, 0
  %v53 = vsel %vm42, %v26, 0
  %v56 = vsel %vm42, %v27, 0
  %v59 = vsel %vm42, %v28, 0
  %v62 = vsel %vm42, %v29, 0
  %v65 = vsel %vm42, %v30, 0
  %67 = vmatprep.subr.mxu0 0.0
  %68 = vmatpush1.msra.mxu0 %v31
  %69 = vmatprep.subr.mxu0 0.0
  %70 = vmatpush1.msra.mxu0 %v32
  %71 = vmatprep.subr.mxu0 0.0
  %72 = vmatpush1.msra.mxu0 %v33
  %73 = vmatprep.subr.mxu0 0.0
  %74 = vmatpush1.msra.mxu0 %v34
  %75 = vmatprep.subr.mxu0 0.0
  %76 = vmatpush1.msra.mxu0 0.0
  %77 = vmatprep.subr.mxu0 0.0
  %78 = vmatpush1.msra.mxu0 0.0
  %79 = vmatprep.subr.mxu0 0.0
  %80 = vmatpush1.msra.mxu0 0.0
  %81 = vmatprep.subr.mxu0 0.0
  %82 = vmatpush1.msra.mxu0 0.0
  %83 = vmatprep.subr.mxu0 0.0
  %84 = vmatpush1.msra.mxu0 0.0
  %85 = vmatprep.subr.mxu0 0.0
  %86 = vmatpush1.msra.mxu0 0.0
  %87 = vmatprep.subr.mxu0 0.0
  %88 = vmatpush1.msra.mxu0 0.0
  %89 = vmatprep.subr.mxu0 0.0
  %90 = vmatpush1.msra.mxu0 0.0
  %91 = vmatprep.subr.mxu0 0.0
  %92 = vmatpush1.msra.mxu0 0.0
  %93 = vmatprep.subr.mxu0 0.0
  %94 = vmatpush1.msra.mxu0 0.0
  %95 = vmatprep.subr.mxu0 0.0
  %96 = vmatpush1.msra.mxu0 0.0
  %97 = vmatprep.subr.mxu0 0.0
  %98 = vmatpush1.msra.mxu0 0.0
  %99 = vmatprep.subr.mxu0 0.0
  %100 = vmatpush1.msra.mxu0 0.0
  %101 = vmatprep.subr.mxu0 0.0
  %102 = vmatpush1.msra.mxu0 0.0
  %103 = vmatprep.subr.mxu0 0.0
  %104 = vmatpush1.msra.mxu0 0.0
  %105 = vmatprep.subr.mxu0 0.0
  %106 = vmatpush1.msra.mxu0 0.0
  %107 = vmatprep.subr.mxu0 0.0
  %108 = vmatpush1.msra.mxu0 0.0
  %109 = vmatprep.subr.mxu0 0.0
  %110 = vmatpush1.msra.mxu0 0.0
  %111 = vmatprep.subr.mxu0 0.0
  %112 = vmatpush1.msra.mxu0 0.0
  %113 = vmatprep.subr.mxu0 0.0
  %114 = vmatpush1.msra.mxu0 0.0
  %115 = vmatprep.subr.mxu0 0.0
  %116 = vmatpush1.msra.mxu0 0.0
  %117 = vmatprep.subr.mxu0 0.0
  %118 = vmatpush1.msra.mxu0 0.0
  %119 = vmatprep.subr.mxu0 0.0
  %120 = vmatpush1.msra.mxu0 0.0
  %121 = vmatprep.subr.mxu0 0.0
  %122 = vmatpush1.msra.mxu0 0.0
  %123 = vmatprep.subr.mxu0 0.0
  %124 = vmatpush1.msra.mxu0 0.0
  %125 = vmatprep.subr.mxu0 0.0
  %126 = vmatpush1.msra.mxu0 0.0
  %127 = vmatprep.subr.mxu0 0.0
  %128 = vmatpush1.msra.mxu0 0.0
  %129 = vmatprep.subr.mxu0 0.0
  %130 = vmatpush1.msra.mxu0 0.0
  %131 = vmatprep.mubr.f32.mxu0 0.0
  %132 = vmatmul.mubr.f32.gmra.mrb[0].mxu0 %v44
  %v133 = vpop.f32.mrb[0].mxu0
  %v134 = vadd.f32 %v40, %v133
  %v135 = vpop.f32.mrb[0].mxu0
  %136 = vmatprep.mubr.f32.mxu0 0.0
  %137 = vmatmul.mubr.f32.gmra.mrb[0].mxu0 %v47
  %v138 = vpop.f32.mrb[0].mxu0
  %v139 = vadd.f32 %v40, %v138
  %v140 = vpop.f32.mrb[0].mxu0
  %141 = vmatprep.mubr.f32.mxu0 0.0
  %142 = vmatmul.mubr.f32.gmra.mrb[0].mxu0 %v50
  %v143 = vpop.f32.mrb[0].mxu0
  %v144 = vadd.f32 %v40, %v143
  %v145 = vpop.f32.mrb[0].mxu0
  %146 = vmatprep.mubr.f32.mxu0 0.0
  %147 = vmatmul.mubr.f32.gmra.mrb[0].mxu0 %v53
  %v148 = vpop.f32.mrb[0].mxu0
  %v149 = vadd.f32 %v40, %v148
  %v150 = vpop.f32.mrb[0].mxu0
  %151 = vmatprep.mubr.f32.mxu0 0.0
  %152 = vmatmul.mubr.f32.gmra.mrb[0].mxu0 %v56
  %v153 = vpop.f32.mrb[0].mxu0
  %v154 = vadd.f32 %v40, %v153
  %v155 = vpop.f32.mrb[0].mxu0
  %156 = vmatprep.mubr.f32.mxu0 0.0
  %157 = vmatmul.mubr.f32.gmra.mrb[0].mxu0 %v59
  %v158 = vpop.f32.mrb[0].mxu0
  %v159 = vadd.f32 %v40, %v158
  %v160 = vpop.f32.mrb[0].mxu0
  %161 = vmatprep.mubr.f32.mxu0 0.0
  %162 = vmatmul.mubr.f32.gmra.mrb[0].mxu0 %v62
  %v163 = vpop.f32.mrb[0].mxu0
  %v164 = vadd.f32 %v40, %v163
  %v165 = vpop.f32.mrb[0].mxu0
  %166 = vmatprep.mubr.f32.mxu0 0.0
  %167 = vmatmul.mubr.f32.gmra.mrb[0].mxu0 %v65
  %v168 = vpop.f32.mrb[0].mxu0
  %v169 = vadd.f32 %v40, %v168
  %v170 = vpop.f32.mrb[0].mxu0
  %171 = vdwg.mxu0
  %172 = vst [vmem:[#allocation2] sm:$0xff] %v134
  %173 = vst [vmem:[#allocation2 + $0x8] sm:$0xff] %v139
  %174 = vst [vmem:[#allocation2 + $0x10] sm:$0xff] %v144
  %175 = vst [vmem:[#allocation2 + $0x18] sm:$0xff] %v149
  %176 = vst [vmem:[#allocation2 + $0x20] sm:$0xff] %v154
  %177 = vst [vmem:[#allocation2 + $0x28] sm:$0xff] %v159
  %178 = vst [vmem:[#allocation2 + $0x30] sm:$0xff] %v164
  %179 = vst [vmem:[#allocation2 + $0x38] sm:$0xff] %v169
  %v180 = vld [vmem:[%s2] sm:$0xff]
  %v181 = vld [vmem:[%s2 + $0x8] sm:$0xff]
  %v182 = vld [vmem:[%s2 + $0x10] sm:$0xff]
  %v183 = vld [vmem:[%s2 + $0x18] sm:$0xff]
  %v184 = vld [vmem:[#allocation2] sm:$0xff]
  %v186 = vsel %vm42, 0.0, 0
  %188 = vmatprep.subr.mxu0 0.0
  %189 = vmatpush1.msra.mxu0 %v180
  %190 = vmatprep.subr.mxu0 0.0
  %191 = vmatpush1.msra.mxu0 %v181
  %192 = vmatprep.subr.mxu0 0.0
  %193 = vmatpush1.msra.mxu0 %v182
  %194 = vmatprep.subr.mxu0 0.0
  %195 = vmatpush1.msra.mxu0 %v183
  %196 = vmatprep.subr.mxu0 0.0
  %197 = vmatpush1.msra.mxu0 0.0
  %198 = vmatprep.subr.mxu0 0.0
  %199 = vmatpush1.msra.mxu0 0.0
  %200 = vmatprep.subr.mxu0 0.0
  %201 = vmatpush1.msra.mxu0 0.0
  %202 = vmatprep.subr.mxu0 0.0
  %203 = vmatpush1.msra.mxu0 0.0
  %204 = vmatprep.subr.mxu0 0.0
  %205 = vmatpush1.msra.mxu0 0.0
  %206 = vmatprep.subr.mxu0 0.0
  %207 = vmatpush1.msra.mxu0 0.0
  %208 = vmatprep.subr.mxu0 0.0
  %209 = vmatpush1.msra.mxu0 0.0
  %210 = vmatprep.subr.mxu0 0.0
  %211 = vmatpush1.msra.mxu0 0.0
  %212 = vmatprep.subr.mxu0 0.0
  %213 = vmatpush1.msra.mxu0 0.0
  %214 = vmatprep.subr.mxu0 0.0
  %215 = vmatpush1.msra.mxu0 0.0
  %216 = vmatprep.subr.mxu0 0.0
  %217 = vmatpush1.msra.mxu0 0.0
  %218 = vmatprep.subr.mxu0 0.0
  %219 = vmatpush1.msra.mxu0 0.0
  %220 = vmatprep.subr.mxu0 0.0
  %221 = vmatpush1.msra.mxu0 0.0
  %222 = vmatprep.subr.mxu0 0.0
  %223 = vmatpush1.msra.mxu0 0.0
  %224 = vmatprep.subr.mxu0 0.0
  %225 = vmatpush1.msra.mxu0 0.0
  %226 = vmatprep.subr.mxu0 0.0
  %227 = vmatpush1.msra.mxu0 0.0
  %228 = vmatprep.subr.mxu0 0.0
  %229 = vmatpush1.msra.mxu0 0.0
  %230 = vmatprep.subr.mxu0 0.0
  %231 = vmatpush1.msra.mxu0 0.0
  %232 = vmatprep.subr.mxu0 0.0
  %233 = vmatpush1.msra.mxu0 0.0
  %234 = vmatprep.subr.mxu0 0.0
  %235 = vmatpush1.msra.mxu0 0.0
  %236 = vmatprep.subr.mxu0 0.0
  %237 = vmatpush1.msra.mxu0 0.0
  %238 = vmatprep.subr.mxu0 0.0
  %239 = vmatpush1.msra.mxu0 0.0
  %240 = vmatprep.subr.mxu0 0.0
  %241 = vmatpush1.msra.mxu0 0.0
  %242 = vmatprep.subr.mxu0 0.0
  %243 = vmatpush1.msra.mxu0 0.0
  %244 = vmatprep.subr.mxu0 0.0
  %245 = vmatpush1.msra.mxu0 0.0
  %246 = vmatprep.subr.mxu0 0.0
  %247 = vmatpush1.msra.mxu0 0.0
  %248 = vmatprep.subr.mxu0 0.0
  %249 = vmatpush1.msra.mxu0 0.0
  %250 = vmatprep.subr.mxu0 0.0
  %251 = vmatpush1.msra.mxu0 0.0
  %252 = vmatprep.mubr.f32.mxu0 0.0
  %253 = vmatmul.mubr.f32.gmra.mrb[0].mxu0 %v186
  %v254 = vpop.f32.mrb[0].mxu0
  %v255 = vadd.f32 0.0, %v254
  %v256 = vpop.f32.mrb[0].mxu0
  %257 = vdwg.mxu0
  %v258 = vadd.f32 %v184, %v255
  %v259 = vxor.u32 %v258, 2147483648
  %v260 = vmul.f32 %v259, 1.442695
  %v261 = vpow.pop %v260
  %v262 = vadd.f32 %v261, 1.0
  %v263 = vrcp.pop %v262
  %v264 = vmul.f32 1.0, %v263
  %v265 = vtanh.pop %v258
  %v266 = vmul.f32 %v264, 0.0
  %268 = vrot.lane.b32.xlu0 %v265, 64
  %v269 = vpop.permute.xlu0 %268
  %v271 = vmul.f32 %v264, %v269
  %273 = vrot.lane.b32.xlu0 %v271, 32
  %v274 = vpop.permute.xlu0 %273
  %v276 = vadd.f32 %v266, %v274
  %v277 = vtanh.pop %v276
  %279 = vrot.lane.b32.xlu0 %v277, 64
  %v280 = vpop.permute.xlu0 %279
  %v282 = vmul.f32 %v264, %v280
  %284 = vrot.lane.b32.xlu0 %v282, 32
  %v285 = vpop.permute.xlu0 %284
  %287 = vst.msk [vmem:[#allocation3] sm:$0xff] %vm42, %v285
  %s288 = scalar_lea.vmem [#allocation2], 8
  %v289 = vld [vmem:[%s288] sm:$0xff]
  %v290 = vsel %vm42, %v285, 0
  %292 = vmatprep.subr.mxu0 0.0
  %293 = vmatpush1.msra.mxu0 %v180
  %294 = vmatprep.subr.mxu0 0.0
  %295 = vmatpush1.msra.mxu0 %v181
  %296 = vmatprep.subr.mxu0 0.0
  %297 = vmatpush1.msra.mxu0 %v182
  %298 = vmatprep.subr.mxu0 0.0
  %299 = vmatpush1.msra.mxu0 %v183
  %300 = vmatprep.subr.mxu0 0.0
  %301 = vmatpush1.msra.mxu0 0.0
  %302 = vmatprep.subr.mxu0 0.0
  %303 = vmatpush1.msra.mxu0 0.0
  %304 = vmatprep.subr.mxu0 0.0
  %305 = vmatpush1.msra.mxu0 0.0
  %306 = vmatprep.subr.mxu0 0.0
  %307 = vmatpush1.msra.mxu0 0.0
  %308 = vmatprep.subr.mxu0 0.0
  %309 = vmatpush1.msra.mxu0 0.0
  %310 = vmatprep.subr.mxu0 0.0
  %311 = vmatpush1.msra.mxu0 0.0
  %312 = vmatprep.subr.mxu0 0.0
  %313 = vmatpush1.msra.mxu0 0.0
  %314 = vmatprep.subr.mxu0 0.0
  %315 = vmatpush1.msra.mxu0 0.0
  %316 = vmatprep.subr.mxu0 0.0
  %317 = vmatpush1.msra.mxu0 0.0
  %318 = vmatprep.subr.mxu0 0.0
  %319 = vmatpush1.msra.mxu0 0.0
  %320 = vmatprep.subr.mxu0 0.0
  %321 = vmatpush1.msra.mxu0 0.0
  %322 = vmatprep.subr.mxu0 0.0
  %323 = vmatpush1.msra.mxu0 0.0
  %324 = vmatprep.subr.mxu0 0.0
  %325 = vmatpush1.msra.mxu0 0.0
  %326 = vmatprep.subr.mxu0 0.0
  %327 = vmatpush1.msra.mxu0 0.0
  %328 = vmatprep.subr.mxu0 0.0
  %329 = vmatpush1.msra.mxu0 0.0
  %330 = vmatprep.subr.mxu0 0.0
  %331 = vmatpush1.msra.mxu0 0.0
  %332 = vmatprep.subr.mxu0 0.0
  %333 = vmatpush1.msra.mxu0 0.0
  %334 = vmatprep.subr.mxu0 0.0
  %335 = vmatpush1.msra.mxu0 0.0
  %336 = vmatprep.subr.mxu0 0.0
  %337 = vmatpush1.msra.mxu0 0.0
  %338 = vmatprep.subr.mxu0 0.0
  %339 = vmatpush1.msra.mxu0 0.0
  %340 = vmatprep.subr.mxu0 0.0
  %341 = vmatpush1.msra.mxu0 0.0
  %342 = vmatprep.subr.mxu0 0.0
  %343 = vmatpush1.msra.mxu0 0.0
  %344 = vmatprep.subr.mxu0 0.0
  %345 = vmatpush1.msra.mxu0 0.0
  %346 = vmatprep.subr.mxu0 0.0
  %347 = vmatpush1.msra.mxu0 0.0
  %348 = vmatprep.subr.mxu0 0.0
  %349 = vmatpush1.msra.mxu0 0.0
  %350 = vmatprep.subr.mxu0 0.0
  %351 = vmatpush1.msra.mxu0 0.0
  %352 = vmatprep.subr.mxu0 0.0
  %353 = vmatpush1.msra.mxu0 0.0
  %354 = vmatprep.subr.mxu0 0.0
  %355 = vmatpush1.msra.mxu0 0.0
  %356 = vmatprep.mubr.f32.mxu0 0.0
  %357 = vmatmul.mubr.f32.gmra.mrb[0].mxu0 %v290
  %v358 = vpop.f32.mrb[0].mxu0
  %v359 = vadd.f32 0.0, %v358
  %v360 = vpop.f32.mrb[0].mxu0
  %361 = vdwg.mxu0
  %v362 = vadd.f32 %v289, %v359
  %v363 = vxor.u32 %v362, 2147483648
  %v364 = vmul.f32 %v363, 1.442695
  %v365 = vpow.pop %v364
  %v366 = vadd.f32 %v365, 1.0
  %v367 = vrcp.pop %v366
  %v368 = vmul.f32 1.0, %v367
  %v369 = vtanh.pop %v362
  %v370 = vmul.f32 %v368, %v276
  %372 = vrot.lane.b32.xlu0 %v369, 64
  %v373 = vpop.permute.xlu0 %372
  %v375 = vmul.f32 %v368, %v373
  %377 = vrot.lane.b32.xlu0 %v375, 32
  %v378 = vpop.permute.xlu0 %377
  %v380 = vadd.f32 %v370, %v378
  %v381 = vtanh.pop %v380
  %383 = vrot.lane.b32.xlu0 %v381, 64
  %v384 = vpop.permute.xlu0 %383
  %v386 = vmul.f32 %v368, %v384
  %388 = vrot.lane.b32.xlu0 %v386, 32
  %v389 = vpop.permute.xlu0 %388
  %s391 = scalar_lea.vmem [#allocation3], 8
  %392 = vst.msk [vmem:[%s391] sm:$0xff] %vm42, %v389
  %s393 = scalar_lea.vmem [#allocation2], 16
  %v394 = vld [vmem:[%s393] sm:$0xff]
  %v395 = vsel %vm42, %v389, 0
  %397 = vmatprep.subr.mxu0 0.0
  %398 = vmatpush1.msra.mxu0 %v180
  %399 = vmatprep.subr.mxu0 0.0
  %400 = vmatpush1.msra.mxu0 %v181
  %401 = vmatprep.subr.mxu0 0.0
  %402 = vmatpush1.msra.mxu0 %v182
  %403 = vmatprep.subr.mxu0 0.0
  %404 = vmatpush1.msra.mxu0 %v183
  %405 = vmatprep.subr.mxu0 0.0
  %406 = vmatpush1.msra.mxu0 0.0
  %407 = vmatprep.subr.mxu0 0.0
  %408 = vmatpush1.msra.mxu0 0.0
  %409 = vmatprep.subr.mxu0 0.0
  %410 = vmatpush1.msra.mxu0 0.0
  %411 = vmatprep.subr.mxu0 0.0
  %412 = vmatpush1.msra.mxu0 0.0
  %413 = vmatprep.subr.mxu0 0.0
  %414 = vmatpush1.msra.mxu0 0.0
  %415 = vmatprep.subr.mxu0 0.0
  %416 = vmatpush1.msra.mxu0 0.0
  %417 = vmatprep.subr.mxu0 0.0
  %418 = vmatpush1.msra.mxu0 0.0
  %419 = vmatprep.subr.mxu0 0.0
  %420 = vmatpush1.msra.mxu0 0.0
  %421 = vmatprep.subr.mxu0 0.0
  %422 = vmatpush1.msra.mxu0 0.0
  %423 = vmatprep.subr.mxu0 0.0
  %424 = vmatpush1.msra.mxu0 0.0
  %425 = vmatprep.subr.mxu0 0.0
  %426 = vmatpush1.msra.mxu0 0.0
  %427 = vmatprep.subr.mxu0 0.0
  %428 = vmatpush1.msra.mxu0 0.0
  %429 = vmatprep.subr.mxu0 0.0
  %430 = vmatpush1.msra.mxu0 0.0
  %431 = vmatprep.subr.mxu0 0.0
  %432 = vmatpush1.msra.mxu0 0.0
  %433 = vmatprep.subr.mxu0 0.0
  %434 = vmatpush1.msra.mxu0 0.0
  %435 = vmatprep.subr.mxu0 0.0
  %436 = vmatpush1.msra.mxu0 0.0
  %437 = vmatprep.subr.mxu0 0.0
  %438 = vmatpush1.msra.mxu0 0.0
  %439 = vmatprep.subr.mxu0 0.0
  %440 = vmatpush1.msra.mxu0 0.0
  %441 = vmatprep.subr.mxu0 0.0
  %442 = vmatpush1.msra.mxu0 0.0
  %443 = vmatprep.subr.mxu0 0.0
  %444 = vmatpush1.msra.mxu0 0.0
  %445 = vmatprep.subr.mxu0 0.0
  %446 = vmatpush1.msra.mxu0 0.0
  %447 = vmatprep.subr.mxu0 0.0
  %448 = vmatpush1.msra.mxu0 0.0
  %449 = vmatprep.subr.mxu0 0.0
  %450 = vmatpush1.msra.mxu0 0.0
  %451 = vmatprep.subr.mxu0 0.0
  %452 = vmatpush1.msra.mxu0 0.0
  %453 = vmatprep.subr.mxu0 0.0
  %454 = vmatpush1.msra.mxu0 0.0
  %455 = vmatprep.subr.mxu0 0.0
  %456 = vmatpush1.msra.mxu0 0.0
  %457 = vmatprep.subr.mxu0 0.0
  %458 = vmatpush1.msra.mxu0 0.0
  %459 = vmatprep.subr.mxu0 0.0
  %460 = vmatpush1.msra.mxu0 0.0
  %461 = vmatprep.mubr.f32.mxu0 0.0
  %462 = vmatmul.mubr.f32.gmra.mrb[0].mxu0 %v395
  %v463 = vpop.f32.mrb[0].mxu0
  %v464 = vadd.f32 0.0, %v463
  %v465 = vpop.f32.mrb[0].mxu0
  %466 = vdwg.mxu0
  %v467 = vadd.f32 %v394, %v464
  %v468 = vxor.u32 %v467, 2147483648
  %v469 = vmul.f32 %v468, 1.442695
  %v470 = vpow.pop %v469
  %v471 = vadd.f32 %v470, 1.0
  %v472 = vrcp.pop %v471
  %v473 = vmul.f32 1.0, %v472
  %v474 = vtanh.pop %v467
  %v475 = vmul.f32 %v473, %v380
  %477 = vrot.lane.b32.xlu0 %v474, 64
  %v478 = vpop.permute.xlu0 %477
  %v480 = vmul.f32 %v473, %v478
  %482 = vrot.lane.b32.xlu0 %v480, 32
  %v483 = vpop.permute.xlu0 %482
  %v485 = vadd.f32 %v475, %v483
  %v486 = vtanh.pop %v485
  %488 = vrot.lane.b32.xlu0 %v486, 64
  %v489 = vpop.permute.xlu0 %488
  %v491 = vmul.f32 %v473, %v489
  %493 = vrot.lane.b32.xlu0 %v491, 32
  %v494 = vpop.permute.xlu0 %493
  %s496 = scalar_lea.vmem [#allocation3], 16
  %497 = vst.msk [vmem:[%s496] sm:$0xff] %vm42, %v494
  %s498 = scalar_lea.vmem [#allocation2], 24
  %v499 = vld [vmem:[%s498] sm:$0xff]
  %v500 = vsel %vm42, %v494, 0
  %502 = vmatprep.subr.mxu0 0.0
  %503 = vmatpush1.msra.mxu0 %v180
  %504 = vmatprep.subr.mxu0 0.0
  %505 = vmatpush1.msra.mxu0 %v181
  %506 = vmatprep.subr.mxu0 0.0
  %507 = vmatpush1.msra.mxu0 %v182
  %508 = vmatprep.subr.mxu0 0.0
  %509 = vmatpush1.msra.mxu0 %v183
  %510 = vmatprep.subr.mxu0 0.0
  %511 = vmatpush1.msra.mxu0 0.0
  %512 = vmatprep.subr.mxu0 0.0
  %513 = vmatpush1.msra.mxu0 0.0
  %514 = vmatprep.subr.mxu0 0.0
  %515 = vmatpush1.msra.mxu0 0.0
  %516 = vmatprep.subr.mxu0 0.0
  %517 = vmatpush1.msra.mxu0 0.0
  %518 = vmatprep.subr.mxu0 0.0
  %519 = vmatpush1.msra.mxu0 0.0
  %520 = vmatprep.subr.mxu0 0.0
  %521 = vmatpush1.msra.mxu0 0.0
  %522 = vmatprep.subr.mxu0 0.0
  %523 = vmatpush1.msra.mxu0 0.0
  %524 = vmatprep.subr.mxu0 0.0
  %525 = vmatpush1.msra.mxu0 0.0
  %526 = vmatprep.subr.mxu0 0.0
  %527 = vmatpush1.msra.mxu0 0.0
  %528 = vmatprep.subr.mxu0 0.0
  %529 = vmatpush1.msra.mxu0 0.0
  %530 = vmatprep.subr.mxu0 0.0
  %531 = vmatpush1.msra.mxu0 0.0
  %532 = vmatprep.subr.mxu0 0.0
  %533 = vmatpush1.msra.mxu0 0.0
  %534 = vmatprep.subr.mxu0 0.0
  %535 = vmatpush1.msra.mxu0 0.0
  %536 = vmatprep.subr.mxu0 0.0
  %537 = vmatpush1.msra.mxu0 0.0
  %538 = vmatprep.subr.mxu0 0.0
  %539 = vmatpush1.msra.mxu0 0.0
  %540 = vmatprep.subr.mxu0 0.0
  %541 = vmatpush1.msra.mxu0 0.0
  %542 = vmatprep.subr.mxu0 0.0
  %543 = vmatpush1.msra.mxu0 0.0
  %544 = vmatprep.subr.mxu0 0.0
  %545 = vmatpush1.msra.mxu0 0.0
  %546 = vmatprep.subr.mxu0 0.0
  %547 = vmatpush1.msra.mxu0 0.0
  %548 = vmatprep.subr.mxu0 0.0
  %549 = vmatpush1.msra.mxu0 0.0
  %550 = vmatprep.subr.mxu0 0.0
  %551 = vmatpush1.msra.mxu0 0.0
  %552 = vmatprep.subr.mxu0 0.0
  %553 = vmatpush1.msra.mxu0 0.0
  %554 = vmatprep.subr.mxu0 0.0
  %555 = vmatpush1.msra.mxu0 0.0
  %556 = vmatprep.subr.mxu0 0.0
  %557 = vmatpush1.msra.mxu0 0.0
  %558 = vmatprep.subr.mxu0 0.0
  %559 = vmatpush1.msra.mxu0 0.0
  %560 = vmatprep.subr.mxu0 0.0
  %561 = vmatpush1.msra.mxu0 0.0
  %562 = vmatprep.subr.mxu0 0.0
  %563 = vmatpush1.msra.mxu0 0.0
  %564 = vmatprep.subr.mxu0 0.0
  %565 = vmatpush1.msra.mxu0 0.0
  %566 = vmatprep.mubr.f32.mxu0 0.0
  %567 = vmatmul.mubr.f32.gmra.mrb[0].mxu0 %v500
  %v568 = vpop.f32.mrb[0].mxu0
  %v569 = vadd.f32 0.0, %v568
  %v570 = vpop.f32.mrb[0].mxu0
  %571 = vdwg.mxu0
  %v572 = vadd.f32 %v499, %v569
  %v573 = vxor.u32 %v572, 2147483648
  %v574 = vmul.f32 %v573, 1.442695
  %v575 = vpow.pop %v574
  %v576 = vadd.f32 %v575, 1.0
  %v577 = vrcp.pop %v576
  %v578 = vmul.f32 1.0, %v577
  %v579 = vtanh.pop %v572
  %v580 = vmul.f32 %v578, %v485
  %582 = vrot.lane.b32.xlu0 %v579, 64
  %v583 = vpop.permute.xlu0 %582
  %v585 = vmul.f32 %v578, %v583
  %587 = vrot.lane.b32.xlu0 %v585, 32
  %v588 = vpop.permute.xlu0 %587
  %v590 = vadd.f32 %v580, %v588
  %v591 = vtanh.pop %v590
  %593 = vrot.lane.b32.xlu0 %v591, 64
  %v594 = vpop.permute.xlu0 %593
  %v596 = vmul.f32 %v578, %v594
  %598 = vrot.lane.b32.xlu0 %v596, 32
  %v599 = vpop.permute.xlu0 %598
  %s601 = scalar_lea.vmem [#allocation3], 24
  %602 = vst.msk [vmem:[%s601] sm:$0xff] %vm42, %v599
  %s603 = scalar_lea.vmem [#allocation2], 32
  %v604 = vld [vmem:[%s603] sm:$0xff]
  %v605 = vsel %vm42, %v599, 0
  %607 = vmatprep.subr.mxu0 0.0
  %608 = vmatpush1.msra.mxu0 %v180
  %609 = vmatprep.subr.mxu0 0.0
  %610 = vmatpush1.msra.mxu0 %v181
  %611 = vmatprep.subr.mxu0 0.0
  %612 = vmatpush1.msra.mxu0 %v182
  %613 = vmatprep.subr.mxu0 0.0
  %614 = vmatpush1.msra.mxu0 %v183
  %615 = vmatprep.subr.mxu0 0.0
  %616 = vmatpush1.msra.mxu0 0.0
  %617 = vmatprep.subr.mxu0 0.0
  %618 = vmatpush1.msra.mxu0 0.0
  %619 = vmatprep.subr.mxu0 0.0
  %620 = vmatpush1.msra.mxu0 0.0
  %621 = vmatprep.subr.mxu0 0.0
  %622 = vmatpush1.msra.mxu0 0.0
  %623 = vmatprep.subr.mxu0 0.0
  %624 = vmatpush1.msra.mxu0 0.0
  %625 = vmatprep.subr.mxu0 0.0
  %626 = vmatpush1.msra.mxu0 0.0
  %627 = vmatprep.subr.mxu0 0.0
  %628 = vmatpush1.msra.mxu0 0.0
  %629 = vmatprep.subr.mxu0 0.0
  %630 = vmatpush1.msra.mxu0 0.0
  %631 = vmatprep.subr.mxu0 0.0
  %632 = vmatpush1.msra.mxu0 0.0
  %633 = vmatprep.subr.mxu0 0.0
  %634 = vmatpush1.msra.mxu0 0.0
  %635 = vmatprep.subr.mxu0 0.0
  %636 = vmatpush1.msra.mxu0 0.0
  %637 = vmatprep.subr.mxu0 0.0
  %638 = vmatpush1.msra.mxu0 0.0
  %639 = vmatprep.subr.mxu0 0.0
  %640 = vmatpush1.msra.mxu0 0.0
  %641 = vmatprep.subr.mxu0 0.0
  %642 = vmatpush1.msra.mxu0 0.0
  %643 = vmatprep.subr.mxu0 0.0
  %644 = vmatpush1.msra.mxu0 0.0
  %645 = vmatprep.subr.mxu0 0.0
  %646 = vmatpush1.msra.mxu0 0.0
  %647 = vmatprep.subr.mxu0 0.0
  %648 = vmatpush1.msra.mxu0 0.0
  %649 = vmatprep.subr.mxu0 0.0
  %650 = vmatpush1.msra.mxu0 0.0
  %651 = vmatprep.subr.mxu0 0.0
  %652 = vmatpush1.msra.mxu0 0.0
  %653 = vmatprep.subr.mxu0 0.0
  %654 = vmatpush1.msra.mxu0 0.0
  %655 = vmatprep.subr.mxu0 0.0
  %656 = vmatpush1.msra.mxu0 0.0
  %657 = vmatprep.subr.mxu0 0.0
  %658 = vmatpush1.msra.mxu0 0.0
  %659 = vmatprep.subr.mxu0 0.0
  %660 = vmatpush1.msra.mxu0 0.0
  %661 = vmatprep.subr.mxu0 0.0
  %662 = vmatpush1.msra.mxu0 0.0
  %663 = vmatprep.subr.mxu0 0.0
  %664 = vmatpush1.msra.mxu0 0.0
  %665 = vmatprep.subr.mxu0 0.0
  %666 = vmatpush1.msra.mxu0 0.0
  %667 = vmatprep.subr.mxu0 0.0
  %668 = vmatpush1.msra.mxu0 0.0
  %669 = vmatprep.subr.mxu0 0.0
  %670 = vmatpush1.msra.mxu0 0.0
  %671 = vmatprep.mubr.f32.mxu0 0.0
  %672 = vmatmul.mubr.f32.gmra.mrb[0].mxu0 %v605
  %v673 = vpop.f32.mrb[0].mxu0
  %v674 = vadd.f32 0.0, %v673
  %v675 = vpop.f32.mrb[0].mxu0
  %676 = vdwg.mxu0
  %v677 = vadd.f32 %v604, %v674
  %v678 = vxor.u32 %v677, 2147483648
  %v679 = vmul.f32 %v678, 1.442695
  %v680 = vpow.pop %v679
  %v681 = vadd.f32 %v680, 1.0
  %v682 = vrcp.pop %v681
  %v683 = vmul.f32 1.0, %v682
  %v684 = vtanh.pop %v677
  %v685 = vmul.f32 %v683, %v590
  %687 = vrot.lane.b32.xlu0 %v684, 64
  %v688 = vpop.permute.xlu0 %687
  %v690 = vmul.f32 %v683, %v688
  %692 = vrot.lane.b32.xlu0 %v690, 32
  %v693 = vpop.permute.xlu0 %692
  %v695 = vadd.f32 %v685, %v693
  %v696 = vtanh.pop %v695
  %698 = vrot.lane.b32.xlu0 %v696, 64
  %v699 = vpop.permute.xlu0 %698
  %v701 = vmul.f32 %v683, %v699
  %703 = vrot.lane.b32.xlu0 %v701, 32
  %v704 = vpop.permute.xlu0 %703
  %s706 = scalar_lea.vmem [#allocation3], 32
  %707 = vst.msk [vmem:[%s706] sm:$0xff] %vm42, %v704
  %s708 = scalar_lea.vmem [#allocation2], 40
  %v709 = vld [vmem:[%s708] sm:$0xff]
  %v710 = vsel %vm42, %v704, 0
  %712 = vmatprep.subr.mxu0 0.0
  %713 = vmatpush1.msra.mxu0 %v180
  %714 = vmatprep.subr.mxu0 0.0
  %715 = vmatpush1.msra.mxu0 %v181
  %716 = vmatprep.subr.mxu0 0.0
  %717 = vmatpush1.msra.mxu0 %v182
  %718 = vmatprep.subr.mxu0 0.0
  %719 = vmatpush1.msra.mxu0 %v183
  %720 = vmatprep.subr.mxu0 0.0
  %721 = vmatpush1.msra.mxu0 0.0
  %722 = vmatprep.subr.mxu0 0.0
  %723 = vmatpush1.msra.mxu0 0.0
  %724 = vmatprep.subr.mxu0 0.0
  %725 = vmatpush1.msra.mxu0 0.0
  %726 = vmatprep.subr.mxu0 0.0
  %727 = vmatpush1.msra.mxu0 0.0
  %728 = vmatprep.subr.mxu0 0.0
  %729 = vmatpush1.msra.mxu0 0.0
  %730 = vmatprep.subr.mxu0 0.0
  %731 = vmatpush1.msra.mxu0 0.0
  %732 = vmatprep.subr.mxu0 0.0
  %733 = vmatpush1.msra.mxu0 0.0
  %734 = vmatprep.subr.mxu0 0.0
  %735 = vmatpush1.msra.mxu0 0.0
  %736 = vmatprep.subr.mxu0 0.0
  %737 = vmatpush1.msra.mxu0 0.0
  %738 = vmatprep.subr.mxu0 0.0
  %739 = vmatpush1.msra.mxu0 0.0
  %740 = vmatprep.subr.mxu0 0.0
  %741 = vmatpush1.msra.mxu0 0.0
  %742 = vmatprep.subr.mxu0 0.0
  %743 = vmatpush1.msra.mxu0 0.0
  %744 = vmatprep.subr.mxu0 0.0
  %745 = vmatpush1.msra.mxu0 0.0
  %746 = vmatprep.subr.mxu0 0.0
  %747 = vmatpush1.msra.mxu0 0.0
  %748 = vmatprep.subr.mxu0 0.0
  %749 = vmatpush1.msra.mxu0 0.0
  %750 = vmatprep.subr.mxu0 0.0
  %751 = vmatpush1.msra.mxu0 0.0
  %752 = vmatprep.subr.mxu0 0.0
  %753 = vmatpush1.msra.mxu0 0.0
  %754 = vmatprep.subr.mxu0 0.0
  %755 = vmatpush1.msra.mxu0 0.0
  %756 = vmatprep.subr.mxu0 0.0
  %757 = vmatpush1.msra.mxu0 0.0
  %758 = vmatprep.subr.mxu0 0.0
  %759 = vmatpush1.msra.mxu0 0.0
  %760 = vmatprep.subr.mxu0 0.0
  %761 = vmatpush1.msra.mxu0 0.0
  %762 = vmatprep.subr.mxu0 0.0
  %763 = vmatpush1.msra.mxu0 0.0
  %764 = vmatprep.subr.mxu0 0.0
  %765 = vmatpush1.msra.mxu0 0.0
  %766 = vmatprep.subr.mxu0 0.0
  %767 = vmatpush1.msra.mxu0 0.0
  %768 = vmatprep.subr.mxu0 0.0
  %769 = vmatpush1.msra.mxu0 0.0
  %770 = vmatprep.subr.mxu0 0.0
  %771 = vmatpush1.msra.mxu0 0.0
  %772 = vmatprep.subr.mxu0 0.0
  %773 = vmatpush1.msra.mxu0 0.0
  %774 = vmatprep.subr.mxu0 0.0
  %775 = vmatpush1.msra.mxu0 0.0
  %776 = vmatprep.mubr.f32.mxu0 0.0
  %777 = vmatmul.mubr.f32.gmra.mrb[0].mxu0 %v710
  %v778 = vpop.f32.mrb[0].mxu0
  %v779 = vadd.f32 0.0, %v778
  %v780 = vpop.f32.mrb[0].mxu0
  %781 = vdwg.mxu0
  %v782 = vadd.f32 %v709, %v779
  %v783 = vxor.u32 %v782, 2147483648
  %v784 = vmul.f32 %v783, 1.442695
  %v785 = vpow.pop %v784
  %v786 = vadd.f32 %v785, 1.0
  %v787 = vrcp.pop %v786
  %v788 = vmul.f32 1.0, %v787
  %v789 = vtanh.pop %v782
  %v790 = vmul.f32 %v788, %v695
  %792 = vrot.lane.b32.xlu0 %v789, 64
  %v793 = vpop.permute.xlu0 %792
  %v795 = vmul.f32 %v788, %v793
  %797 = vrot.lane.b32.xlu0 %v795, 32
  %v798 = vpop.permute.xlu0 %797
  %v800 = vadd.f32 %v790, %v798
  %v801 = vtanh.pop %v800
  %803 = vrot.lane.b32.xlu0 %v801, 64
  %v804 = vpop.permute.xlu0 %803
  %v806 = vmul.f32 %v788, %v804
  %808 = vrot.lane.b32.xlu0 %v806, 32
  %v809 = vpop.permute.xlu0 %808
  %s811 = scalar_lea.vmem [#allocation3], 40
  %812 = vst.msk [vmem:[%s811] sm:$0xff] %vm42, %v809
  %s813 = scalar_lea.vmem [#allocation2], 48
  %v814 = vld [vmem:[%s813] sm:$0xff]
  %v815 = vsel %vm42, %v809, 0
  %817 = vmatprep.subr.mxu0 0.0
  %818 = vmatpush1.msra.mxu0 %v180
  %819 = vmatprep.subr.mxu0 0.0
  %820 = vmatpush1.msra.mxu0 %v181
  %821 = vmatprep.subr.mxu0 0.0
  %822 = vmatpush1.msra.mxu0 %v182
  %823 = vmatprep.subr.mxu0 0.0
  %824 = vmatpush1.msra.mxu0 %v183
  %825 = vmatprep.subr.mxu0 0.0
  %826 = vmatpush1.msra.mxu0 0.0
  %827 = vmatprep.subr.mxu0 0.0
  %828 = vmatpush1.msra.mxu0 0.0
  %829 = vmatprep.subr.mxu0 0.0
  %830 = vmatpush1.msra.mxu0 0.0
  %831 = vmatprep.subr.mxu0 0.0
  %832 = vmatpush1.msra.mxu0 0.0
  %833 = vmatprep.subr.mxu0 0.0
  %834 = vmatpush1.msra.mxu0 0.0
  %835 = vmatprep.subr.mxu0 0.0
  %836 = vmatpush1.msra.mxu0 0.0
  %837 = vmatprep.subr.mxu0 0.0
  %838 = vmatpush1.msra.mxu0 0.0
  %839 = vmatprep.subr.mxu0 0.0
  %840 = vmatpush1.msra.mxu0 0.0
  %841 = vmatprep.subr.mxu0 0.0
  %842 = vmatpush1.msra.mxu0 0.0
  %843 = vmatprep.subr.mxu0 0.0
  %844 = vmatpush1.msra.mxu0 0.0
  %845 = vmatprep.subr.mxu0 0.0
  %846 = vmatpush1.msra.mxu0 0.0
  %847 = vmatprep.subr.mxu0 0.0
  %848 = vmatpush1.msra.mxu0 0.0
  %849 = vmatprep.subr.mxu0 0.0
  %850 = vmatpush1.msra.mxu0 0.0
  %851 = vmatprep.subr.mxu0 0.0
  %852 = vmatpush1.msra.mxu0 0.0
  %853 = vmatprep.subr.mxu0 0.0
  %854 = vmatpush1.msra.mxu0 0.0
  %855 = vmatprep.subr.mxu0 0.0
  %856 = vmatpush1.msra.mxu0 0.0
  %857 = vmatprep.subr.mxu0 0.0
  %858 = vmatpush1.msra.mxu0 0.0
  %859 = vmatprep.subr.mxu0 0.0
  %860 = vmatpush1.msra.mxu0 0.0
  %861 = vmatprep.subr.mxu0 0.0
  %862 = vmatpush1.msra.mxu0 0.0
  %863 = vmatprep.subr.mxu0 0.0
  %864 = vmatpush1.msra.mxu0 0.0
  %865 = vmatprep.subr.mxu0 0.0
  %866 = vmatpush1.msra.mxu0 0.0
  %867 = vmatprep.subr.mxu0 0.0
  %868 = vmatpush1.msra.mxu0 0.0
  %869 = vmatprep.subr.mxu0 0.0
  %870 = vmatpush1.msra.mxu0 0.0
  %871 = vmatprep.subr.mxu0 0.0
  %872 = vmatpush1.msra.mxu0 0.0
  %873 = vmatprep.subr.mxu0 0.0
  %874 = vmatpush1.msra.mxu0 0.0
  %875 = vmatprep.subr.mxu0 0.0
  %876 = vmatpush1.msra.mxu0 0.0
  %877 = vmatprep.subr.mxu0 0.0
  %878 = vmatpush1.msra.mxu0 0.0
  %879 = vmatprep.subr.mxu0 0.0
  %880 = vmatpush1.msra.mxu0 0.0
  %881 = vmatprep.mubr.f32.mxu0 0.0
  %882 = vmatmul.mubr.f32.gmra.mrb[0].mxu0 %v815
  %v883 = vpop.f32.mrb[0].mxu0
  %v884 = vadd.f32 0.0, %v883
  %v885 = vpop.f32.mrb[0].mxu0
  %886 = vdwg.mxu0
  %v887 = vadd.f32 %v814, %v884
  %v888 = vxor.u32 %v887, 2147483648
  %v889 = vmul.f32 %v888, 1.442695
  %v890 = vpow.pop %v889
  %v891 = vadd.f32 %v890, 1.0
  %v892 = vrcp.pop %v891
  %v893 = vmul.f32 1.0, %v892
  %v894 = vtanh.pop %v887
  %v895 = vmul.f32 %v893, %v800
  %897 = vrot.lane.b32.xlu0 %v894, 64
  %v898 = vpop.permute.xlu0 %897
  %v900 = vmul.f32 %v893, %v898
  %902 = vrot.lane.b32.xlu0 %v900, 32
  %v903 = vpop.permute.xlu0 %902
  %v905 = vadd.f32 %v895, %v903
  %v906 = vtanh.pop %v905
  %908 = vrot.lane.b32.xlu0 %v906, 64
  %v909 = vpop.permute.xlu0 %908
  %v911 = vmul.f32 %v893, %v909
  %913 = vrot.lane.b32.xlu0 %v911, 32
  %v914 = vpop.permute.xlu0 %913
  %s916 = scalar_lea.vmem [#allocation3], 48
  %917 = vst.msk [vmem:[%s916] sm:$0xff] %vm42, %v914
  %s918 = scalar_lea.vmem [#allocation2], 56
  %v919 = vld [vmem:[%s918] sm:$0xff]
  %v920 = vsel %vm42, %v914, 0
  %922 = vmatprep.subr.mxu0 0.0
  %923 = vmatpush1.msra.mxu0 %v180
  %924 = vmatprep.subr.mxu0 0.0
  %925 = vmatpush1.msra.mxu0 %v181
  %926 = vmatprep.subr.mxu0 0.0
  %927 = vmatpush1.msra.mxu0 %v182
  %928 = vmatprep.subr.mxu0 0.0
  %929 = vmatpush1.msra.mxu0 %v183
  %930 = vmatprep.subr.mxu0 0.0
  %931 = vmatpush1.msra.mxu0 0.0
  %932 = vmatprep.subr.mxu0 0.0
  %933 = vmatpush1.msra.mxu0 0.0
  %934 = vmatprep.subr.mxu0 0.0
  %935 = vmatpush1.msra.mxu0 0.0
  %936 = vmatprep.subr.mxu0 0.0
  %937 = vmatpush1.msra.mxu0 0.0
  %938 = vmatprep.subr.mxu0 0.0
  %939 = vmatpush1.msra.mxu0 0.0
  %940 = vmatprep.subr.mxu0 0.0
  %941 = vmatpush1.msra.mxu0 0.0
  %942 = vmatprep.subr.mxu0 0.0
  %943 = vmatpush1.msra.mxu0 0.0
  %944 = vmatprep.subr.mxu0 0.0
  %945 = vmatpush1.msra.mxu0 0.0
  %946 = vmatprep.subr.mxu0 0.0
  %947 = vmatpush1.msra.mxu0 0.0
  %948 = vmatprep.subr.mxu0 0.0
  %949 = vmatpush1.msra.mxu0 0.0
  %950 = vmatprep.subr.mxu0 0.0
  %951 = vmatpush1.msra.mxu0 0.0
  %952 = vmatprep.subr.mxu0 0.0
  %953 = vmatpush1.msra.mxu0 0.0
  %954 = vmatprep.subr.mxu0 0.0
  %955 = vmatpush1.msra.mxu0 0.0
  %956 = vmatprep.subr.mxu0 0.0
  %957 = vmatpush1.msra.mxu0 0.0
  %958 = vmatprep.subr.mxu0 0.0
  %959 = vmatpush1.msra.mxu0 0.0
  %960 = vmatprep.subr.mxu0 0.0
  %961 = vmatpush1.msra.mxu0 0.0
  %962 = vmatprep.subr.mxu0 0.0
  %963 = vmatpush1.msra.mxu0 0.0
  %964 = vmatprep.subr.mxu0 0.0
  %965 = vmatpush1.msra.mxu0 0.0
  %966 = vmatprep.subr.mxu0 0.0
  %967 = vmatpush1.msra.mxu0 0.0
  %968 = vmatprep.subr.mxu0 0.0
  %969 = vmatpush1.msra.mxu0 0.0
  %970 = vmatprep.subr.mxu0 0.0
  %971 = vmatpush1.msra.mxu0 0.0
  %972 = vmatprep.subr.mxu0 0.0
  %973 = vmatpush1.msra.mxu0 0.0
  %974 = vmatprep.subr.mxu0 0.0
  %975 = vmatpush1.msra.mxu0 0.0
  %976 = vmatprep.subr.mxu0 0.0
  %977 = vmatpush1.msra.mxu0 0.0
  %978 = vmatprep.subr.mxu0 0.0
  %979 = vmatpush1.msra.mxu0 0.0
  %980 = vmatprep.subr.mxu0 0.0
  %981 = vmatpush1.msra.mxu0 0.0
  %982 = vmatprep.subr.mxu0 0.0
  %983 = vmatpush1.msra.mxu0 0.0
  %984 = vmatprep.subr.mxu0 0.0
  %985 = vmatpush1.msra.mxu0 0.0
  %986 = vmatprep.mubr.f32.mxu0 0.0
  %987 = vmatmul.mubr.f32.gmra.mrb[0].mxu0 %v920
  %v988 = vpop.f32.mrb[0].mxu0
  %v989 = vadd.f32 0.0, %v988
  %v990 = vpop.f32.mrb[0].mxu0
  %991 = vdwg.mxu0
  %v992 = vadd.f32 %v919, %v989
  %v993 = vxor.u32 %v992, 2147483648
  %v994 = vmul.f32 %v993, 1.442695
  %v995 = vpow.pop %v994
  %v996 = vadd.f32 %v995, 1.0
  %v997 = vrcp.pop %v996
  %v998 = vmul.f32 1.0, %v997
  %v999 = vtanh.pop %v992
  %v1000 = vmul.f32 %v998, %v905
  %1002 = vrot.lane.b32.xlu0 %v999, 64
  %v1003 = vpop.permute.xlu0 %1002
  %v1005 = vmul.f32 %v998, %v1003
  %1007 = vrot.lane.b32.xlu0 %v1005, 32
  %v1008 = vpop.permute.xlu0 %1007
  %v1010 = vadd.f32 %v1000, %v1008
  %v1011 = vtanh.pop %v1010
  %1013 = vrot.lane.b32.xlu0 %v1011, 64
  %v1014 = vpop.permute.xlu0 %1013
  %v1016 = vmul.f32 %v998, %v1014
  %1018 = vrot.lane.b32.xlu0 %v1016, 32
  %v1019 = vpop.permute.xlu0 %1018
  %s1021 = scalar_lea.vmem [#allocation3], 56
  %1022 = vst.msk [vmem:[%s1021] sm:$0xff] %vm42, %v1019
  %v1023 = vld [vmem:[#allocation3] sm:$0xff]
  %v1024 = vld [vmem:[#allocation3 + $0x8] sm:$0xff]
  %v1025 = vld [vmem:[#allocation3 + $0x10] sm:$0xff]
  %v1026 = vld [vmem:[#allocation3 + $0x18] sm:$0xff]
  %v1027 = vld [vmem:[#allocation3 + $0x20] sm:$0xff]
  %v1028 = vld [vmem:[#allocation3 + $0x28] sm:$0xff]
  %v1029 = vld [vmem:[#allocation3 + $0x30] sm:$0xff]
  %v1030 = vld [vmem:[#allocation3 + $0x38] sm:$0xff]
  %v1031 = vld [vmem:[%s4] sm:$0xff]
  %v1032 = vld [vmem:[%s4 + $0x8] sm:$0xff]
  %v1033 = vld [vmem:[%s4 + $0x10] sm:$0xff]
  %v1034 = vld [vmem:[%s4 + $0x18] sm:$0xff]
  %v1035 = vld [vmem:[%s5] sm:$0x1]
  %v1037 = vlaneseq
  %v1038 = vshrl.u32 %v1037, 7
  %v1039 = vsub.s32 0, %v1038
  %v1040 = vrot.slane %v1035, %v1039
  %v1043 = vsel %vm42, %v1023, 0
  %v1046 = vsel %vm42, %v1024, 0
  %v1049 = vsel %vm42, %v1025, 0
  %v1052 = vsel %vm42, %v1026, 0
  %v1055 = vsel %vm42, %v1027, 0
  %v1058 = vsel %vm42, %v1028, 0
  %v1061 = vsel %vm42, %v1029, 0
  %v1064 = vsel %vm42, %v1030, 0
  %1066 = vmatprep.subr.mxu0 0.0
  %1067 = vmatpush1.msra.mxu0 %v1031
  %1068 = vmatprep.subr.mxu0 0.0
  %1069 = vmatpush1.msra.mxu0 %v1032
  %1070 = vmatprep.subr.mxu0 0.0
  %1071 = vmatpush1.msra.mxu0 %v1033
  %1072 = vmatprep.subr.mxu0 0.0
  %1073 = vmatpush1.msra.mxu0 %v1034
  %1074 = vmatprep.subr.mxu0 0.0
  %1075 = vmatpush1.msra.mxu0 0.0
  %1076 = vmatprep.subr.mxu0 0.0
  %1077 = vmatpush1.msra.mxu0 0.0
  %1078 = vmatprep.subr.mxu0 0.0
  %1079 = vmatpush1.msra.mxu0 0.0
  %1080 = vmatprep.subr.mxu0 0.0
  %1081 = vmatpush1.msra.mxu0 0.0
  %1082 = vmatprep.subr.mxu0 0.0
  %1083 = vmatpush1.msra.mxu0 0.0
  %1084 = vmatprep.subr.mxu0 0.0
  %1085 = vmatpush1.msra.mxu0 0.0
  %1086 = vmatprep.subr.mxu0 0.0
  %1087 = vmatpush1.msra.mxu0 0.0
  %1088 = vmatprep.subr.mxu0 0.0
  %1089 = vmatpush1.msra.mxu0 0.0
  %1090 = vmatprep.subr.mxu0 0.0
  %1091 = vmatpush1.msra.mxu0 0.0
  %1092 = vmatprep.subr.mxu0 0.0
  %1093 = vmatpush1.msra.mxu0 0.0
  %1094 = vmatprep.subr.mxu0 0.0
  %1095 = vmatpush1.msra.mxu0 0.0
  %1096 = vmatprep.subr.mxu0 0.0
  %1097 = vmatpush1.msra.mxu0 0.0
  %1098 = vmatprep.subr.mxu0 0.0
  %1099 = vmatpush1.msra.mxu0 0.0
  %1100 = vmatprep.subr.mxu0 0.0
  %1101 = vmatpush1.msra.mxu0 0.0
  %1102 = vmatprep.subr.mxu0 0.0
  %1103 = vmatpush1.msra.mxu0 0.0
  %1104 = vmatprep.subr.mxu0 0.0
  %1105 = vmatpush1.msra.mxu0 0.0
  %1106 = vmatprep.subr.mxu0 0.0
  %1107 = vmatpush1.msra.mxu0 0.0
  %1108 = vmatprep.subr.mxu0 0.0
  %1109 = vmatpush1.msra.mxu0 0.0
  %1110 = vmatprep.subr.mxu0 0.0
  %1111 = vmatpush1.msra.mxu0 0.0
  %1112 = vmatprep.subr.mxu0 0.0
  %1113 = vmatpush1.msra.mxu0 0.0
  %1114 = vmatprep.subr.mxu0 0.0
  %1115 = vmatpush1.msra.mxu0 0.0
  %1116 = vmatprep.subr.mxu0 0.0
  %1117 = vmatpush1.msra.mxu0 0.0
  %1118 = vmatprep.subr.mxu0 0.0
  %1119 = vmatpush1.msra.mxu0 0.0
  %1120 = vmatprep.subr.mxu0 0.0
  %1121 = vmatpush1.msra.mxu0 0.0
  %1122 = vmatprep.subr.mxu0 0.0
  %1123 = vmatpush1.msra.mxu0 0.0
  %1124 = vmatprep.subr.mxu0 0.0
  %1125 = vmatpush1.msra.mxu0 0.0
  %1126 = vmatprep.subr.mxu0 0.0
  %1127 = vmatpush1.msra.mxu0 0.0
  %1128 = vmatprep.subr.mxu0 0.0
  %1129 = vmatpush1.msra.mxu0 0.0
  %1130 = vmatprep.mubr.f32.mxu0 0.0
  %1131 = vmatmul.mubr.f32.gmra.mrb[0].mxu0 %v1043
  %v1132 = vpop.f32.mrb[0].mxu0
  %v1133 = vadd.f32 %v1040, %v1132
  %v1134 = vpop.f32.mrb[0].mxu0
  %1135 = vmatprep.mubr.f32.mxu0 0.0
  %1136 = vmatmul.mubr.f32.gmra.mrb[0].mxu0 %v1046
  %v1137 = vpop.f32.mrb[0].mxu0
  %v1138 = vadd.f32 %v1040, %v1137
  %v1139 = vpop.f32.mrb[0].mxu0
  %1140 = vmatprep.mubr.f32.mxu0 0.0
  %1141 = vmatmul.mubr.f32.gmra.mrb[0].mxu0 %v1049
  %v1142 = vpop.f32.mrb[0].mxu0
  %v1143 = vadd.f32 %v1040, %v1142
  %v1144 = vpop.f32.mrb[0].mxu0
  %1145 = vmatprep.mubr.f32.mxu0 0.0
  %1146 = vmatmul.mubr.f32.gmra.mrb[0].mxu0 %v1052
  %v1147 = vpop.f32.mrb[0].mxu0
  %v1148 = vadd.f32 %v1040, %v1147
  %v1149 = vpop.f32.mrb[0].mxu0
  %1150 = vmatprep.mubr.f32.mxu0 0.0
  %1151 = vmatmul.mubr.f32.gmra.mrb[0].mxu0 %v1055
  %v1152 = vpop.f32.mrb[0].mxu0
  %v1153 = vadd.f32 %v1040, %v1152
  %v1154 = vpop.f32.mrb[0].mxu0
  %1155 = vmatprep.mubr.f32.mxu0 0.0
  %1156 = vmatmul.mubr.f32.gmra.mrb[0].mxu0 %v1058
  %v1157 = vpop.f32.mrb[0].mxu0
  %v1158 = vadd.f32 %v1040, %v1157
  %v1159 = vpop.f32.mrb[0].mxu0
  %1160 = vmatprep.mubr.f32.mxu0 0.0
  %1161 = vmatmul.mubr.f32.gmra.mrb[0].mxu0 %v1061
  %v1162 = vpop.f32.mrb[0].mxu0
  %v1163 = vadd.f32 %v1040, %v1162
  %v1164 = vpop.f32.mrb[0].mxu0
  %1165 = vmatprep.mubr.f32.mxu0 0.0
  %1166 = vmatmul.mubr.f32.gmra.mrb[0].mxu0 %v1064
  %v1167 = vpop.f32.mrb[0].mxu0
  %v1168 = vadd.f32 %v1040, %v1167
  %v1169 = vpop.f32.mrb[0].mxu0
  %1170 = vdwg.mxu0
  %1171 = vst [vmem:[%s6] sm:$0xff] %v1133
  %1172 = vst [vmem:[%s6 + $0x8] sm:$0xff] %v1138
  %1173 = vst [vmem:[%s6 + $0x10] sm:$0xff] %v1143
  %1174 = vst [vmem:[%s6 + $0x18] sm:$0xff] %v1148
  %1175 = vst [vmem:[%s6 + $0x20] sm:$0xff] %v1153
  %1176 = vst [vmem:[%s6 + $0x28] sm:$0xff] %v1158
  %1177 = vst [vmem:[%s6 + $0x30] sm:$0xff] %v1163
  %1178 = vst [vmem:[%s6 + $0x38] sm:$0xff] %v1168
  // Predicated region
  $region26: #{lstm_text_forward.1} parent=0 // pred_check
    _
  $region27: #{lstm_text_forward.1} parent=0 // pred_check_branch
    %1180 = sbr.rel (0) target = $region29
  $region28: #{lstm_text_forward.1} parent=0 // pred_region
    _
  $region29: #{lstm_text_forward.1} parent=0 // pred_fallthru
    _
  // Predicated region
  $region30: #{lstm_text_forward.1} parent=0 // pred_check
    _
  $region31: #{lstm_text_forward.1} parent=0 // pred_check_branch
    %1182 = sbr.rel (0) target = $region33
  $region32: #{lstm_text_forward.1} parent=0 // pred_region
    _
  $region33: #{lstm_text_forward.1} parent=0 // pred_fallthru
    _

</llo_original>
